<compile_context>
chip_gen: v7x
topology: tpu7x:2x2x1
jax: 0.10.0
libtpu: 0.0.40
codegen_flags: <defaults>
</compile_context>

<pallas_src>
import functools

import jax
import jax.numpy as jnp
from jax import lax
from jax.experimental import pallas as pl
from jax.experimental.pallas import tpu as pltpu

LN_EPS = 1e-5          # torch.nn.LayerNorm default
LRELU_SLOPE = 0.01     # nn.LeakyReLU(0.01)
LANE = 128


def _round_up(n, m):
    return ((n + m - 1) // m) * m


def _mxu_dot(lhs, rhs):
    # bf16 weights -> feed the MXU bf16 operands, accumulate in f32.
    if rhs.dtype == jnp.bfloat16:
        lhs = lhs.astype(jnp.bfloat16)
    return jnp.dot(lhs, rhs, preferred_element_type=jnp.float32)


# ----------------------------------------------------------------------------
# Fused whole-network kernel
# ----------------------------------------------------------------------------
def _dffnn_kernel(*refs, true_dims):
    """Fused DFFNN forward for one (TB, pad(d_in)) batch tile.

    refs = (x_ref,
            w0, b0, g0, beta0,            # hidden layer 0
            ...,
            w_last, b_last,               # final plain Linear
            o_ref)

    All feature dims are zero-padded per layer to a multiple of 128 lanes.
    Padded weight columns / bias / gamma / beta lanes are exactly zero, so
    lane-axis sums only see the true features (exact one-pass LN stats) and
    padded lanes of every activation stay zero.
    """
    n_hidden = len(true_dims) - 2
    x_ref = refs[0]
    o_ref = refs[-1]
    p = 1

    h = x_ref[...]
    for l in range(n_hidden):
        w_ref, b_ref, g_ref, beta_ref = refs[p:p + 4]
        p += 4
        d_out = true_dims[l + 1]
        y = _mxu_dot(h, w_ref[...]) + b_ref[...]
        # One-pass stats over the lane axis (padded lanes of y are exactly 0),
        # divided by the TRUE width; variance clamped >= 0 against f32
        # cancellation (e.g. all-zero padded batch rows where y == bias).
        inv_d = 1.0 / float(d_out)
        mean = jnp.sum(y, axis=-1, keepdims=True) * inv_d
        mean_sq = jnp.sum(y * y, axis=-1, keepdims=True) * inv_d
        var = jnp.maximum(mean_sq - mean * mean, 0.0)
        yhat = (y - mean) * lax.rsqrt(var + LN_EPS)
        # gamma/beta are zero in padded lanes -> z (and h) stays zero there.
        z = yhat * g_ref[...] + beta_ref[...]
        # LeakyReLU(0.01): slope < 1 so max(z, slope*z) == leaky_relu(z).
        h = jnp.maximum(z, LRELU_SLOPE * z)

    # Final plain Linear (no LayerNorm / activation).
    w_ref, b_ref = refs[p:p + 2]
    y = _mxu_dot(h, w_ref[...]) + b_ref[...]
    o_ref[...] = y.astype(o_ref.dtype)


# ----------------------------------------------------------------------------
# Wrapper: batch grid, per-layer params resident across grid steps
# ----------------------------------------------------------------------------
def make_forward(dims, weight_dtype=jnp.float32, single_buffer_params=True):
    dims = tuple(int(d) for d in dims)
    pads = tuple(_round_up(d, LANE) for d in dims)
    n_hidden = len(dims) - 2
    kernel = functools.partial(_dffnn_kernel, true_dims=dims)

    # Constant-index_map params are never re-fetched -> single buffer.
    param_kwargs = {}
    if single_buffer_params:
        param_kwargs = dict(pipeline_mode=pl.Buffered(1))

    def const_spec(shape):
        return pl.BlockSpec(shape, lambda i: (0, 0), **param_kwargs)

    wd_bytes = jnp.dtype(weight_dtype).itemsize
    param_specs = []
    param_bytes = 0
    for l in range(n_hidden):
        kp, npad = pads[l], pads[l + 1]
        param_specs += [const_spec((kp, npad)),     # w
                        const_spec((1, npad)),      # b
                        const_spec((1, npad)),      # gamma
                        const_spec((1, npad))]      # beta
        param_bytes += kp * npad * wd_bytes + 3 * npad * 4
    kp, npad = pads[-2], pads[-1]
    param_specs += [const_spec((kp, npad)), const_spec((1, npad))]
    param_bytes += kp * npad * wd_bytes + npad * 4

    @jax.jit
    def forward(x, *packed):
        batch, d_in = x.shape
        # Big batch tiles (per-step overhead ~0.35us dominates small tiles);
        # cap at 512 rows, keep a multiple of 8 (f32 sublane).
        tb = min(_round_up(batch, 8), 512)
        # If the whole batch fits in one tile, split so the "parallel" axis
        # has >= 2 steps and both v7x TensorCores get work.
        if batch > 8 and _round_up(batch, tb) == tb:
            tb = _round_up(-(-batch // 2), 8)
        b_pad = _round_up(batch, tb)

        # Avoid re-materializing the input when no padding is needed.
        if b_pad == batch and d_in == pads[0]:
            x_p = x
        else:
            x_p = jnp.pad(x, ((0, b_pad - batch), (0, pads[0] - d_in)))

        buf_mult = 1 if single_buffer_params else 2
        act_bytes = (tb * pads[0] + tb * pads[-1]) * 4 * 2  # x/out dbl-buffer
        needed = param_bytes * buf_mult + act_bytes
        vmem_limit = int(min(max(needed * 2, 32 * 1024 * 1024),
                             64 * 1024 * 1024))

        out = pl.pallas_call(
            kernel,
            out_shape=jax.ShapeDtypeStruct((b_pad, pads[-1]), jnp.float32),
            grid_spec=pltpu.PrefetchScalarGridSpec(
                num_scalar_prefetch=0,
                grid=(b_pad // tb,),
                in_specs=[pl.BlockSpec((tb, pads[0]), lambda i: (i, 0))]
                         + param_specs,
                out_specs=pl.BlockSpec((tb, pads[-1]), lambda i: (i, 0)),
            ),
            compiler_params=pltpu.CompilerParams(
                dimension_semantics=("parallel",),
                vmem_limit_bytes=vmem_limit),
        )(x_p, *packed)

        if b_pad != batch or pads[-1] != dims[-1]:
            out = out[:batch, :dims[-1]]
        return out

    return forward


# ----------------------------------------------------------------------------
# Parameter init (matches torch.nn.Linear / nn.LayerNorm init schemes;
# deterministic, synthetic) + packing into per-layer padded slabs
# ----------------------------------------------------------------------------
def init_params(key, input_size, hidden_sizes, output_size):
    params = {"hidden": [], "ln": []}
    dims = [input_size] + list(hidden_sizes)
    for i in range(len(hidden_sizes)):
        d_in, d_out = dims[i], dims[i + 1]
        key, kw, kb = jax.random.split(key, 3)
        bound = 1.0 / jnp.sqrt(d_in)
        w = jax.random.uniform(kw, (d_in, d_out), jnp.float32, -bound, bound)
        b = jax.random.uniform(kb, (d_out,), jnp.float32, -bound, bound)
        params["hidden"].append((w, b))
        params["ln"].append((jnp.ones((d_out,), jnp.float32),
                             jnp.zeros((d_out,), jnp.float32)))
    d_in, d_out = hidden_sizes[-1], output_size
    key, kw, kb = jax.random.split(key, 3)
    bound = 1.0 / jnp.sqrt(d_in)
    params["out"] = (
        jax.random.uniform(kw, (d_in, d_out), jnp.float32, -bound, bound),
        jax.random.uniform(kb, (d_out,), jnp.float32, -bound, bound),
    )
    return params


def pack_params(params, dims, weight_dtype=jnp.float32):
    """Zero-pad each layer's params to its own lane-dense multiple of 128."""
    dims = tuple(int(d) for d in dims)
    pads = tuple(_round_up(d, LANE) for d in dims)
    packed = []
    for l, ((w, b), (g, beta)) in enumerate(zip(params["hidden"],
                                                params["ln"])):
        kp, npad = pads[l], pads[l + 1]
        wp = (jnp.zeros((kp, npad), weight_dtype)
              .at[:w.shape[0], :w.shape[1]].set(w.astype(weight_dtype)))
        bp = jnp.zeros((1, npad), jnp.float32).at[0, :b.shape[0]].set(b)
        gp = jnp.zeros((1, npad), jnp.float32).at[0, :g.shape[0]].set(g)
        tp = jnp.zeros((1, npad), jnp.float32).at[0, :beta.shape[0]].set(beta)
        packed += [wp, bp, gp, tp]
    w, b = params["out"]
    kp, npad = pads[-2], pads[-1]
    wp = (jnp.zeros((kp, npad), weight_dtype)
          .at[:w.shape[0], :w.shape[1]].set(w.astype(weight_dtype)))
    bp = jnp.zeros((1, npad), jnp.float32).at[0, :b.shape[0]].set(b)
    packed += [wp, bp]
    return packed


def dffnn_reference(x, params):
    """Pure-JAX reference for correctness checking."""
    for (w, b), (g, beta) in zip(params["hidden"], params["ln"]):
        y = x @ w + b
        mean = jnp.mean(y, axis=-1, keepdims=True)
        var = jnp.mean((y - mean) ** 2, axis=-1, keepdims=True)
        yhat = (y - mean) * lax.rsqrt(var + LN_EPS)
        z = yhat * g + beta
        x = jnp.where(z > 0, z, LRELU_SLOPE * z)
    w_out, b_out = params["out"]
    return x @ w_out + b_out


# ----------------------------------------------------------------------------
if __name__ == "__main__":
    input_size = 32
    hidden_sizes = [64, 32]
    output_size = 8
    batch = 8

    key = jax.random.PRNGKey(0)
    key, kx = jax.random.split(key)
    x = jax.random.normal(kx, (batch, input_size), jnp.float32)
    params = init_params(key, input_size, hidden_sizes, output_size)

    dims = (input_size,) + tuple(hidden_sizes) + (output_size,)
    ref = dffnn_reference(x, params)

    def run(weight_dtype, single_buffer):
        fwd = make_forward(dims, weight_dtype=weight_dtype,
                           single_buffer_params=single_buffer)
        packed = pack_params(params, dims, weight_dtype=weight_dtype)
        return jax.block_until_ready(fwd(x, *packed))

    try:
        # Preferred configuration: single-buffered resident params.
        out_f32 = run(jnp.float32, True)     # exact path
        out_bf16 = run(jnp.bfloat16, True)   # production (bf16 MXU) path
    except Exception:
        # Fallback if this Pallas build rejects pl.Buffered(1).
        out_f32 = run(jnp.float32, False)
        out_bf16 = run(jnp.bfloat16, False)

    assert out_f32.shape == (batch, output_size)
    assert jnp.allclose(out_f32, ref, atol=5e-4, rtol=5e-4), \
        "f32 kernel mismatch vs reference"

    assert out_bf16.shape == (batch, output_size)
    assert bool(jnp.all(jnp.isfinite(out_bf16)))
    assert jnp.allclose(out_bf16, ref, atol=2.5e-1, rtol=1e-1), \
        "bf16 kernel mismatch vs reference (beyond bf16 tolerance)"

    print("KERNEL_OK")
</pallas_src>

<mosaic_0001>
module attributes {stable_mosaic.version = 11 : i64} {
  func.func @_dffnn_kernel(%arg0: i32, %arg1: memref<8x128xf32, #tpu.memory_space<vmem>>, %arg2: memref<128x128xf32, #tpu.memory_space<vmem>>, %arg3: memref<1x128xf32, #tpu.memory_space<vmem>>, %arg4: memref<1x128xf32, #tpu.memory_space<vmem>>, %arg5: memref<1x128xf32, #tpu.memory_space<vmem>>, %arg6: memref<128x128xf32, #tpu.memory_space<vmem>>, %arg7: memref<1x128xf32, #tpu.memory_space<vmem>>, %arg8: memref<1x128xf32, #tpu.memory_space<vmem>>, %arg9: memref<1x128xf32, #tpu.memory_space<vmem>>, %arg10: memref<128x128xf32, #tpu.memory_space<vmem>>, %arg11: memref<1x128xf32, #tpu.memory_space<vmem>>, %arg12: memref<8x128xf32, #tpu.memory_space<vmem>>) attributes {dimension_semantics = [#tpu.dimension_semantics<parallel>], iteration_bounds = array<i64: 1>, scalar_prefetch = 0 : i64, scratch_operands = 0 : i64, tpu.core_type = #tpu.core_type<tc>, window_params = [{transform_indices = @transform_0, window_bounds = array<i64: 8, 128>}, {pipeline_mode = #tpu.pipeline_mode<synchronous>, transform_indices = @transform_1, window_bounds = array<i64: 128, 128>}, {pipeline_mode = #tpu.pipeline_mode<synchronous>, transform_indices = @transform_2, window_bounds = array<i64: 1, 128>}, {pipeline_mode = #tpu.pipeline_mode<synchronous>, transform_indices = @transform_3, window_bounds = array<i64: 1, 128>}, {pipeline_mode = #tpu.pipeline_mode<synchronous>, transform_indices = @transform_4, window_bounds = array<i64: 1, 128>}, {pipeline_mode = #tpu.pipeline_mode<synchronous>, transform_indices = @transform_5, window_bounds = array<i64: 128, 128>}, {pipeline_mode = #tpu.pipeline_mode<synchronous>, transform_indices = @transform_6, window_bounds = array<i64: 1, 128>}, {pipeline_mode = #tpu.pipeline_mode<synchronous>, transform_indices = @transform_7, window_bounds = array<i64: 1, 128>}, {pipeline_mode = #tpu.pipeline_mode<synchronous>, transform_indices = @transform_8, window_bounds = array<i64: 1, 128>}, {pipeline_mode = #tpu.pipeline_mode<synchronous>, transform_indices = @transform_9, window_bounds = array<i64: 128, 128>}, {pipeline_mode = #tpu.pipeline_mode<synchronous>, transform_indices = @transform_10, window_bounds = array<i64: 1, 128>}, {transform_indices = @transform_11, window_bounds = array<i64: 8, 128>}]} {
    %c0 = arith.constant 0 : index
    %c0_0 = arith.constant 0 : index
    %0 = vector.load %arg1[%c0, %c0_0] : memref<8x128xf32, #tpu.memory_space<vmem>>, vector<8x128xf32>
    %c0_1 = arith.constant 0 : index
    %c0_2 = arith.constant 0 : index
    %1 = vector.load %arg2[%c0_1, %c0_2] : memref<128x128xf32, #tpu.memory_space<vmem>>, vector<128x128xf32>
    %cst = arith.constant dense<0.000000e+00> : vector<8x128xf32>
    %2 = tpu.matmul %0, %1, %cst {dimension_numbers = #tpu.dot_dimension_numbers<[1], [0], [0], [1], [0, 0, 1, 1], [], []>} : vector<8x128xf32>, vector<128x128xf32>, vector<8x128xf32> -> vector<8x128xf32>
    %c0_3 = arith.constant 0 : index
    %c0_4 = arith.constant 0 : index
    %3 = vector.load %arg3[%c0_3, %c0_4] : memref<1x128xf32, #tpu.memory_space<vmem>>, vector<1x128xf32>
    %4 = vector.broadcast %3 : vector<1x128xf32> to vector<8x128xf32>
    %5 = arith.addf %2, %4 : vector<8x128xf32>
    %cst_5 = arith.constant dense<0.000000e+00> : vector<8xf32>
    %6 = vector.multi_reduction <add>, %5, %cst_5 [1] : vector<8x128xf32> to vector<8xf32>
    %7 = vector.shape_cast %6 : vector<8xf32> to vector<8x1xf32>
    %cst_6 = arith.constant 1.562500e-02 : f32
    %8 = vector.broadcast %cst_6 : f32 to vector<8x1xf32>
    %9 = arith.mulf %7, %8 : vector<8x1xf32>
    %10 = arith.mulf %5, %5 : vector<8x128xf32>
    %cst_7 = arith.constant dense<0.000000e+00> : vector<8xf32>
    %11 = vector.multi_reduction <add>, %10, %cst_7 [1] : vector<8x128xf32> to vector<8xf32>
    %12 = vector.shape_cast %11 : vector<8xf32> to vector<8x1xf32>
    %cst_8 = arith.constant 1.562500e-02 : f32
    %13 = vector.broadcast %cst_8 : f32 to vector<8x1xf32>
    %14 = arith.mulf %12, %13 : vector<8x1xf32>
    %15 = arith.mulf %9, %9 : vector<8x1xf32>
    %16 = arith.subf %14, %15 : vector<8x1xf32>
    %cst_9 = arith.constant 0.000000e+00 : f32
    %17 = vector.broadcast %cst_9 : f32 to vector<8x1xf32>
    %18 = arith.maximumf %16, %17 : vector<8x1xf32>
    %19 = vector.broadcast %9 : vector<8x1xf32> to vector<8x128xf32>
    %20 = arith.subf %5, %19 : vector<8x128xf32>
    %cst_10 = arith.constant 9.99999974E-6 : f32
    %21 = vector.broadcast %cst_10 : f32 to vector<8x1xf32>
    %22 = arith.addf %18, %21 : vector<8x1xf32>
    %23 = math.rsqrt %22 : vector<8x1xf32>
    %24 = vector.broadcast %23 : vector<8x1xf32> to vector<8x128xf32>
    %25 = arith.mulf %20, %24 : vector<8x128xf32>
    %c0_11 = arith.constant 0 : index
    %c0_12 = arith.constant 0 : index
    %26 = vector.load %arg4[%c0_11, %c0_12] : memref<1x128xf32, #tpu.memory_space<vmem>>, vector<1x128xf32>
    %27 = vector.broadcast %26 : vector<1x128xf32> to vector<8x128xf32>
    %28 = arith.mulf %25, %27 : vector<8x128xf32>
    %c0_13 = arith.constant 0 : index
    %c0_14 = arith.constant 0 : index
    %29 = vector.load %arg5[%c0_13, %c0_14] : memref<1x128xf32, #tpu.memory_space<vmem>>, vector<1x128xf32>
    %30 = vector.broadcast %29 : vector<1x128xf32> to vector<8x128xf32>
    %31 = arith.addf %28, %30 : vector<8x128xf32>
    %cst_15 = arith.constant 0.00999999977 : f32
    %32 = vector.broadcast %cst_15 : f32 to vector<8x128xf32>
    %33 = arith.mulf %32, %31 : vector<8x128xf32>
    %34 = arith.maximumf %31, %33 : vector<8x128xf32>
    %c0_16 = arith.constant 0 : index
    %c0_17 = arith.constant 0 : index
    %35 = vector.load %arg6[%c0_16, %c0_17] : memref<128x128xf32, #tpu.memory_space<vmem>>, vector<128x128xf32>
    %cst_18 = arith.constant dense<0.000000e+00> : vector<8x128xf32>
    %36 = tpu.matmul %34, %35, %cst_18 {dimension_numbers = #tpu.dot_dimension_numbers<[1], [0], [0], [1], [0, 0, 1, 1], [], []>} : vector<8x128xf32>, vector<128x128xf32>, vector<8x128xf32> -> vector<8x128xf32>
    %c0_19 = arith.constant 0 : index
    %c0_20 = arith.constant 0 : index
    %37 = vector.load %arg7[%c0_19, %c0_20] : memref<1x128xf32, #tpu.memory_space<vmem>>, vector<1x128xf32>
    %38 = vector.broadcast %37 : vector<1x128xf32> to vector<8x128xf32>
    %39 = arith.addf %36, %38 : vector<8x128xf32>
    %cst_21 = arith.constant dense<0.000000e+00> : vector<8xf32>
    %40 = vector.multi_reduction <add>, %39, %cst_21 [1] : vector<8x128xf32> to vector<8xf32>
    %41 = vector.shape_cast %40 : vector<8xf32> to vector<8x1xf32>
    %cst_22 = arith.constant 3.125000e-02 : f32
    %42 = vector.broadcast %cst_22 : f32 to vector<8x1xf32>
    %43 = arith.mulf %41, %42 : vector<8x1xf32>
    %44 = arith.mulf %39, %39 : vector<8x128xf32>
    %cst_23 = arith.constant dense<0.000000e+00> : vector<8xf32>
    %45 = vector.multi_reduction <add>, %44, %cst_23 [1] : vector<8x128xf32> to vector<8xf32>
    %46 = vector.shape_cast %45 : vector<8xf32> to vector<8x1xf32>
    %cst_24 = arith.constant 3.125000e-02 : f32
    %47 = vector.broadcast %cst_24 : f32 to vector<8x1xf32>
    %48 = arith.mulf %46, %47 : vector<8x1xf32>
    %49 = arith.mulf %43, %43 : vector<8x1xf32>
    %50 = arith.subf %48, %49 : vector<8x1xf32>
    %cst_25 = arith.constant 0.000000e+00 : f32
    %51 = vector.broadcast %cst_25 : f32 to vector<8x1xf32>
    %52 = arith.maximumf %50, %51 : vector<8x1xf32>
    %53 = vector.broadcast %43 : vector<8x1xf32> to vector<8x128xf32>
    %54 = arith.subf %39, %53 : vector<8x128xf32>
    %cst_26 = arith.constant 9.99999974E-6 : f32
    %55 = vector.broadcast %cst_26 : f32 to vector<8x1xf32>
    %56 = arith.addf %52, %55 : vector<8x1xf32>
    %57 = math.rsqrt %56 : vector<8x1xf32>
    %58 = vector.broadcast %57 : vector<8x1xf32> to vector<8x128xf32>
    %59 = arith.mulf %54, %58 : vector<8x128xf32>
    %c0_27 = arith.constant 0 : index
    %c0_28 = arith.constant 0 : index
    %60 = vector.load %arg8[%c0_27, %c0_28] : memref<1x128xf32, #tpu.memory_space<vmem>>, vector<1x128xf32>
    %61 = vector.broadcast %60 : vector<1x128xf32> to vector<8x128xf32>
    %62 = arith.mulf %59, %61 : vector<8x128xf32>
    %c0_29 = arith.constant 0 : index
    %c0_30 = arith.constant 0 : index
    %63 = vector.load %arg9[%c0_29, %c0_30] : memref<1x128xf32, #tpu.memory_space<vmem>>, vector<1x128xf32>
    %64 = vector.broadcast %63 : vector<1x128xf32> to vector<8x128xf32>
    %65 = arith.addf %62, %64 : vector<8x128xf32>
    %cst_31 = arith.constant 0.00999999977 : f32
    %66 = vector.broadcast %cst_31 : f32 to vector<8x128xf32>
    %67 = arith.mulf %66, %65 : vector<8x128xf32>
    %68 = arith.maximumf %65, %67 : vector<8x128xf32>
    %c0_32 = arith.constant 0 : index
    %c0_33 = arith.constant 0 : index
    %69 = vector.load %arg10[%c0_32, %c0_33] : memref<128x128xf32, #tpu.memory_space<vmem>>, vector<128x128xf32>
    %cst_34 = arith.constant dense<0.000000e+00> : vector<8x128xf32>
    %70 = tpu.matmul %68, %69, %cst_34 {dimension_numbers = #tpu.dot_dimension_numbers<[1], [0], [0], [1], [0, 0, 1, 1], [], []>} : vector<8x128xf32>, vector<128x128xf32>, vector<8x128xf32> -> vector<8x128xf32>
    %c0_35 = arith.constant 0 : index
    %c0_36 = arith.constant 0 : index
    %71 = vector.load %arg11[%c0_35, %c0_36] : memref<1x128xf32, #tpu.memory_space<vmem>>, vector<1x128xf32>
    %72 = vector.broadcast %71 : vector<1x128xf32> to vector<8x128xf32>
    %73 = arith.addf %70, %72 : vector<8x128xf32>
    %c0_37 = arith.constant 0 : index
    %c0_38 = arith.constant 0 : index
    %74 = vector.load %arg12[%c0_37, %c0_38] : memref<8x128xf32, #tpu.memory_space<vmem>>, vector<8x128xf32>
    tpu.vector_store %arg12[%c0_37, %c0_38], %73 {strides = array<i32>} : memref<8x128xf32, #tpu.memory_space<vmem>>, vector<8x128xf32>,
    return
  }
  func.func @transform_0(%arg0: i32) -> (i32, i32) {
    %c0_i32 = arith.constant 0 : i32
    %c0_i32_0 = arith.constant 0 : i32
    return %arg0, %c0_i32 : i32, i32
  }
  func.func @transform_1(%arg0: i32) -> (i32, i32) {
    %c0_i32 = arith.constant 0 : i32
    %c0_i32_0 = arith.constant 0 : i32
    %c0_i32_1 = arith.constant 0 : i32
    return %c0_i32, %c0_i32_0 : i32, i32
  }
  func.func @transform_2(%arg0: i32) -> (i32, i32) {
    %c0_i32 = arith.constant 0 : i32
    %c0_i32_0 = arith.constant 0 : i32
    %c0_i32_1 = arith.constant 0 : i32
    return %c0_i32, %c0_i32_0 : i32, i32
  }
  func.func @transform_3(%arg0: i32) -> (i32, i32) {
    %c0_i32 = arith.constant 0 : i32
    %c0_i32_0 = arith.constant 0 : i32
    %c0_i32_1 = arith.constant 0 : i32
    return %c0_i32, %c0_i32_0 : i32, i32
  }
  func.func @transform_4(%arg0: i32) -> (i32, i32) {
    %c0_i32 = arith.constant 0 : i32
    %c0_i32_0 = arith.constant 0 : i32
    %c0_i32_1 = arith.constant 0 : i32
    return %c0_i32, %c0_i32_0 : i32, i32
  }
  func.func @transform_5(%arg0: i32) -> (i32, i32) {
    %c0_i32 = arith.constant 0 : i32
    %c0_i32_0 = arith.constant 0 : i32
    %c0_i32_1 = arith.constant 0 : i32
    return %c0_i32, %c0_i32_0 : i32, i32
  }
  func.func @transform_6(%arg0: i32) -> (i32, i32) {
    %c0_i32 = arith.constant 0 : i32
    %c0_i32_0 = arith.constant 0 : i32
    %c0_i32_1 = arith.constant 0 : i32
    return %c0_i32, %c0_i32_0 : i32, i32
  }
  func.func @transform_7(%arg0: i32) -> (i32, i32) {
    %c0_i32 = arith.constant 0 : i32
    %c0_i32_0 = arith.constant 0 : i32
    %c0_i32_1 = arith.constant 0 : i32
    return %c0_i32, %c0_i32_0 : i32, i32
  }
  func.func @transform_8(%arg0: i32) -> (i32, i32) {
    %c0_i32 = arith.constant 0 : i32
    %c0_i32_0 = arith.constant 0 : i32
    %c0_i32_1 = arith.constant 0 : i32
    return %c0_i32, %c0_i32_0 : i32, i32
  }
  func.func @transform_9(%arg0: i32) -> (i32, i32) {
    %c0_i32 = arith.constant 0 : i32
    %c0_i32_0 = arith.constant 0 : i32
    %c0_i32_1 = arith.constant 0 : i32
    return %c0_i32, %c0_i32_0 : i32, i32
  }
  func.func @transform_10(%arg0: i32) -> (i32, i32) {
    %c0_i32 = arith.constant 0 : i32
    %c0_i32_0 = arith.constant 0 : i32
    %c0_i32_1 = arith.constant 0 : i32
    return %c0_i32, %c0_i32_0 : i32, i32
  }
  func.func @transform_11(%arg0: i32) -> (i32, i32) {
    %c0_i32 = arith.constant 0 : i32
    %c0_i32_0 = arith.constant 0 : i32
    return %arg0, %c0_i32 : i32, i32
  }
}

module attributes {stable_mosaic.version = 11 : i64} {
  func.func @_dffnn_kernel(%arg0: i32, %arg1: memref<8x128xf32, #tpu.memory_space<vmem>>, %arg2: memref<128x128xf32, #tpu.memory_space<vmem>>, %arg3: memref<1x128xf32, #tpu.memory_space<vmem>>, %arg4: memref<1x128xf32, #tpu.memory_space<vmem>>, %arg5: memref<1x128xf32, #tpu.memory_space<vmem>>, %arg6: memref<128x128xf32, #tpu.memory_space<vmem>>, %arg7: memref<1x128xf32, #tpu.memory_space<vmem>>, %arg8: memref<1x128xf32, #tpu.memory_space<vmem>>, %arg9: memref<1x128xf32, #tpu.memory_space<vmem>>, %arg10: memref<128x128xf32, #tpu.memory_space<vmem>>, %arg11: memref<1x128xf32, #tpu.memory_space<vmem>>, %arg12: memref<8x128xf32, #tpu.memory_space<vmem>>) attributes {dimension_semantics = [#tpu.dimension_semantics<parallel>], iteration_bounds = array<i64: 1>, scalar_prefetch = 0 : i64, scratch_operands = 0 : i64, tpu.core_type = #tpu.core_type<tc>, window_params = [{transform_indices = @transform_0, window_bounds = array<i64: 8, 128>}, {pipeline_mode = #tpu.pipeline_mode<synchronous>, transform_indices = @transform_1, window_bounds = array<i64: 128, 128>}, {pipeline_mode = #tpu.pipeline_mode<synchronous>, transform_indices = @transform_2, window_bounds = array<i64: 1, 128>}, {pipeline_mode = #tpu.pipeline_mode<synchronous>, transform_indices = @transform_3, window_bounds = array<i64: 1, 128>}, {pipeline_mode = #tpu.pipeline_mode<synchronous>, transform_indices = @transform_4, window_bounds = array<i64: 1, 128>}, {pipeline_mode = #tpu.pipeline_mode<synchronous>, transform_indices = @transform_5, window_bounds = array<i64: 128, 128>}, {pipeline_mode = #tpu.pipeline_mode<synchronous>, transform_indices = @transform_6, window_bounds = array<i64: 1, 128>}, {pipeline_mode = #tpu.pipeline_mode<synchronous>, transform_indices = @transform_7, window_bounds = array<i64: 1, 128>}, {pipeline_mode = #tpu.pipeline_mode<synchronous>, transform_indices = @transform_8, window_bounds = array<i64: 1, 128>}, {pipeline_mode = #tpu.pipeline_mode<synchronous>, transform_indices = @transform_9, window_bounds = array<i64: 128, 128>}, {pipeline_mode = #tpu.pipeline_mode<synchronous>, transform_indices = @transform_10, window_bounds = array<i64: 1, 128>}, {transform_indices = @transform_11, window_bounds = array<i64: 8, 128>}]} {
    %c0 = arith.constant 0 : index
    %c0_0 = arith.constant 0 : index
    %0 = vector.load %arg1[%c0, %c0_0] : memref<8x128xf32, #tpu.memory_space<vmem>>, vector<8x128xf32>
    %c0_1 = arith.constant 0 : index
    %c0_2 = arith.constant 0 : index
    %1 = vector.load %arg2[%c0_1, %c0_2] : memref<128x128xf32, #tpu.memory_space<vmem>>, vector<128x128xf32>
    %cst = arith.constant dense<0.000000e+00> : vector<8x128xf32>
    %2 = tpu.matmul %0, %1, %cst {dimension_numbers = #tpu.dot_dimension_numbers<[1], [0], [0], [1], [0, 0, 1, 1], [], []>} : vector<8x128xf32>, vector<128x128xf32>, vector<8x128xf32> -> vector<8x128xf32>
    %c0_3 = arith.constant 0 : index
    %c0_4 = arith.constant 0 : index
    %3 = vector.load %arg3[%c0_3, %c0_4] : memref<1x128xf32, #tpu.memory_space<vmem>>, vector<1x128xf32>
    %4 = vector.broadcast %3 : vector<1x128xf32> to vector<8x128xf32>
    %5 = arith.addf %2, %4 : vector<8x128xf32>
    %cst_5 = arith.constant dense<0.000000e+00> : vector<8xf32>
    %6 = vector.multi_reduction <add>, %5, %cst_5 [1] : vector<8x128xf32> to vector<8xf32>
    %7 = vector.shape_cast %6 : vector<8xf32> to vector<8x1xf32>
    %cst_6 = arith.constant 1.562500e-02 : f32
    %8 = vector.broadcast %cst_6 : f32 to vector<8x1xf32>
    %9 = arith.mulf %7, %8 : vector<8x1xf32>
    %10 = arith.mulf %5, %5 : vector<8x128xf32>
    %cst_7 = arith.constant dense<0.000000e+00> : vector<8xf32>
    %11 = vector.multi_reduction <add>, %10, %cst_7 [1] : vector<8x128xf32> to vector<8xf32>
    %12 = vector.shape_cast %11 : vector<8xf32> to vector<8x1xf32>
    %cst_8 = arith.constant 1.562500e-02 : f32
    %13 = vector.broadcast %cst_8 : f32 to vector<8x1xf32>
    %14 = arith.mulf %12, %13 : vector<8x1xf32>
    %15 = arith.mulf %9, %9 : vector<8x1xf32>
    %16 = arith.subf %14, %15 : vector<8x1xf32>
    %cst_9 = arith.constant 0.000000e+00 : f32
    %17 = vector.broadcast %cst_9 : f32 to vector<8x1xf32>
    %18 = arith.maximumf %16, %17 : vector<8x1xf32>
    %19 = vector.broadcast %9 : vector<8x1xf32> to vector<8x128xf32>
    %20 = arith.subf %5, %19 : vector<8x128xf32>
    %cst_10 = arith.constant 9.99999974E-6 : f32
    %21 = vector.broadcast %cst_10 : f32 to vector<8x1xf32>
    %22 = arith.addf %18, %21 : vector<8x1xf32>
    %23 = math.rsqrt %22 : vector<8x1xf32>
    %24 = vector.broadcast %23 : vector<8x1xf32> to vector<8x128xf32>
    %25 = arith.mulf %20, %24 : vector<8x128xf32>
    %c0_11 = arith.constant 0 : index
    %c0_12 = arith.constant 0 : index
    %26 = vector.load %arg4[%c0_11, %c0_12] : memref<1x128xf32, #tpu.memory_space<vmem>>, vector<1x128xf32>
    %27 = vector.broadcast %26 : vector<1x128xf32> to vector<8x128xf32>
    %28 = arith.mulf %25, %27 : vector<8x128xf32>
    %c0_13 = arith.constant 0 : index
    %c0_14 = arith.constant 0 : index
    %29 = vector.load %arg5[%c0_13, %c0_14] : memref<1x128xf32, #tpu.memory_space<vmem>>, vector<1x128xf32>
    %30 = vector.broadcast %29 : vector<1x128xf32> to vector<8x128xf32>
    %31 = arith.addf %28, %30 : vector<8x128xf32>
    %cst_15 = arith.constant 0.00999999977 : f32
    %32 = vector.broadcast %cst_15 : f32 to vector<8x128xf32>
    %33 = arith.mulf %32, %31 : vector<8x128xf32>
    %34 = arith.maximumf %31, %33 : vector<8x128xf32>
    %c0_16 = arith.constant 0 : index
    %c0_17 = arith.constant 0 : index
    %35 = vector.load %arg6[%c0_16, %c0_17] : memref<128x128xf32, #tpu.memory_space<vmem>>, vector<128x128xf32>
    %cst_18 = arith.constant dense<0.000000e+00> : vector<8x128xf32>
    %36 = tpu.matmul %34, %35, %cst_18 {dimension_numbers = #tpu.dot_dimension_numbers<[1], [0], [0], [1], [0, 0, 1, 1], [], []>} : vector<8x128xf32>, vector<128x128xf32>, vector<8x128xf32> -> vector<8x128xf32>
    %c0_19 = arith.constant 0 : index
    %c0_20 = arith.constant 0 : index
    %37 = vector.load %arg7[%c0_19, %c0_20] : memref<1x128xf32, #tpu.memory_space<vmem>>, vector<1x128xf32>
    %38 = vector.broadcast %37 : vector<1x128xf32> to vector<8x128xf32>
    %39 = arith.addf %36, %38 : vector<8x128xf32>
    %cst_21 = arith.constant dense<0.000000e+00> : vector<8xf32>
    %40 = vector.multi_reduction <add>, %39, %cst_21 [1] : vector<8x128xf32> to vector<8xf32>
    %41 = vector.shape_cast %40 : vector<8xf32> to vector<8x1xf32>
    %cst_22 = arith.constant 3.125000e-02 : f32
    %42 = vector.broadcast %cst_22 : f32 to vector<8x1xf32>
    %43 = arith.mulf %41, %42 : vector<8x1xf32>
    %44 = arith.mulf %39, %39 : vector<8x128xf32>
    %cst_23 = arith.constant dense<0.000000e+00> : vector<8xf32>
    %45 = vector.multi_reduction <add>, %44, %cst_23 [1] : vector<8x128xf32> to vector<8xf32>
    %46 = vector.shape_cast %45 : vector<8xf32> to vector<8x1xf32>
    %cst_24 = arith.constant 3.125000e-02 : f32
    %47 = vector.broadcast %cst_24 : f32 to vector<8x1xf32>
    %48 = arith.mulf %46, %47 : vector<8x1xf32>
    %49 = arith.mulf %43, %43 : vector<8x1xf32>
    %50 = arith.subf %48, %49 : vector<8x1xf32>
    %cst_25 = arith.constant 0.000000e+00 : f32
    %51 = vector.broadcast %cst_25 : f32 to vector<8x1xf32>
    %52 = arith.maximumf %50, %51 : vector<8x1xf32>
    %53 = vector.broadcast %43 : vector<8x1xf32> to vector<8x128xf32>
    %54 = arith.subf %39, %53 : vector<8x128xf32>
    %cst_26 = arith.constant 9.99999974E-6 : f32
    %55 = vector.broadcast %cst_26 : f32 to vector<8x1xf32>
    %56 = arith.addf %52, %55 : vector<8x1xf32>
    %57 = math.rsqrt %56 : vector<8x1xf32>
    %58 = vector.broadcast %57 : vector<8x1xf32> to vector<8x128xf32>
    %59 = arith.mulf %54, %58 : vector<8x128xf32>
    %c0_27 = arith.constant 0 : index
    %c0_28 = arith.constant 0 : index
    %60 = vector.load %arg8[%c0_27, %c0_28] : memref<1x128xf32, #tpu.memory_space<vmem>>, vector<1x128xf32>
    %61 = vector.broadcast %60 : vector<1x128xf32> to vector<8x128xf32>
    %62 = arith.mulf %59, %61 : vector<8x128xf32>
    %c0_29 = arith.constant 0 : index
    %c0_30 = arith.constant 0 : index
    %63 = vector.load %arg9[%c0_29, %c0_30] : memref<1x128xf32, #tpu.memory_space<vmem>>, vector<1x128xf32>
    %64 = vector.broadcast %63 : vector<1x128xf32> to vector<8x128xf32>
    %65 = arith.addf %62, %64 : vector<8x128xf32>
    %cst_31 = arith.constant 0.00999999977 : f32
    %66 = vector.broadcast %cst_31 : f32 to vector<8x128xf32>
    %67 = arith.mulf %66, %65 : vector<8x128xf32>
    %68 = arith.maximumf %65, %67 : vector<8x128xf32>
    %c0_32 = arith.constant 0 : index
    %c0_33 = arith.constant 0 : index
    %69 = vector.load %arg10[%c0_32, %c0_33] : memref<128x128xf32, #tpu.memory_space<vmem>>, vector<128x128xf32>
    %cst_34 = arith.constant dense<0.000000e+00> : vector<8x128xf32>
    %70 = tpu.matmul %68, %69, %cst_34 {dimension_numbers = #tpu.dot_dimension_numbers<[1], [0], [0], [1], [0, 0, 1, 1], [], []>} : vector<8x128xf32>, vector<128x128xf32>, vector<8x128xf32> -> vector<8x128xf32>
    %c0_35 = arith.constant 0 : index
    %c0_36 = arith.constant 0 : index
    %71 = vector.load %arg11[%c0_35, %c0_36] : memref<1x128xf32, #tpu.memory_space<vmem>>, vector<1x128xf32>
    %72 = vector.broadcast %71 : vector<1x128xf32> to vector<8x128xf32>
    %73 = arith.addf %70, %72 : vector<8x128xf32>
    %c0_37 = arith.constant 0 : index
    %c0_38 = arith.constant 0 : index
    %74 = vector.load %arg12[%c0_37, %c0_38] : memref<8x128xf32, #tpu.memory_space<vmem>>, vector<8x128xf32>
    tpu.vector_store %arg12[%c0_37, %c0_38], %73 {strides = array<i32>} : memref<8x128xf32, #tpu.memory_space<vmem>>, vector<8x128xf32>,
    return
  }
  func.func @transform_0(%arg0: i32) -> (i32, i32) {
    %c0_i32 = arith.constant 0 : i32
    %c0_i32_0 = arith.constant 0 : i32
    return %arg0, %c0_i32 : i32, i32
  }
  func.func @transform_1(%arg0: i32) -> (i32, i32) {
    %c0_i32 = arith.constant 0 : i32
    %c0_i32_0 = arith.constant 0 : i32
    %c0_i32_1 = arith.constant 0 : i32
    return %c0_i32, %c0_i32_0 : i32, i32
  }
  func.func @transform_2(%arg0: i32) -> (i32, i32) {
    %c0_i32 = arith.constant 0 : i32
    %c0_i32_0 = arith.constant 0 : i32
    %c0_i32_1 = arith.constant 0 : i32
    return %c0_i32, %c0_i32_0 : i32, i32
  }
  func.func @transform_3(%arg0: i32) -> (i32, i32) {
    %c0_i32 = arith.constant 0 : i32
    %c0_i32_0 = arith.constant 0 : i32
    %c0_i32_1 = arith.constant 0 : i32
    return %c0_i32, %c0_i32_0 : i32, i32
  }
  func.func @transform_4(%arg0: i32) -> (i32, i32) {
    %c0_i32 = arith.constant 0 : i32
    %c0_i32_0 = arith.constant 0 : i32
    %c0_i32_1 = arith.constant 0 : i32
    return %c0_i32, %c0_i32_0 : i32, i32
  }
  func.func @transform_5(%arg0: i32) -> (i32, i32) {
    %c0_i32 = arith.constant 0 : i32
    %c0_i32_0 = arith.constant 0 : i32
    %c0_i32_1 = arith.constant 0 : i32
    return %c0_i32, %c0_i32_0 : i32, i32
  }
  func.func @transform_6(%arg0: i32) -> (i32, i32) {
    %c0_i32 = arith.constant 0 : i32
    %c0_i32_0 = arith.constant 0 : i32
    %c0_i32_1 = arith.constant 0 : i32
    return %c0_i32, %c0_i32_0 : i32, i32
  }
  func.func @transform_7(%arg0: i32) -> (i32, i32) {
    %c0_i32 = arith.constant 0 : i32
    %c0_i32_0 = arith.constant 0 : i32
    %c0_i32_1 = arith.constant 0 : i32
    return %c0_i32, %c0_i32_0 : i32, i32
  }
  func.func @transform_8(%arg0: i32) -> (i32, i32) {
    %c0_i32 = arith.constant 0 : i32
    %c0_i32_0 = arith.constant 0 : i32
    %c0_i32_1 = arith.constant 0 : i32
    return %c0_i32, %c0_i32_0 : i32, i32
  }
  func.func @transform_9(%arg0: i32) -> (i32, i32) {
    %c0_i32 = arith.constant 0 : i32
    %c0_i32_0 = arith.constant 0 : i32
    %c0_i32_1 = arith.constant 0 : i32
    return %c0_i32, %c0_i32_0 : i32, i32
  }
  func.func @transform_10(%arg0: i32) -> (i32, i32) {
    %c0_i32 = arith.constant 0 : i32
    %c0_i32_0 = arith.constant 0 : i32
    %c0_i32_1 = arith.constant 0 : i32
    return %c0_i32, %c0_i32_0 : i32, i32
  }
  func.func @transform_11(%arg0: i32) -> (i32, i32) {
    %c0_i32 = arith.constant 0 : i32
    %c0_i32_0 = arith.constant 0 : i32
    return %arg0, %c0_i32 : i32, i32
  }
}

</mosaic_0001>

<llo_original>
// kernel: forward.1
$region0: #{forward.1}
  #allocation0 [shape = 'u32[]', space=smem, size = 0x4, offset = 0x4, fixed_abs, tag = 'smem constant byte address 0x4 - core index']
  #allocation1 [shape = 'u32[144,128]{1,0:T(1,128)}', space=vmem, size = 0x12000, scoped, tag = 'internal scratch']
  %s0 = inlined_call_operand.vmem [shape: f32[8,128], index: 0, kind: input, shape index: {}]
  %s1 = inlined_call_operand.hbm [shape: f32[128,128], index: 1, kind: input, shape index: {}]
  %s2 = inlined_call_operand.vmem [shape: f32[1,128], index: 2, kind: input, shape index: {}]
  %s3 = inlined_call_operand.vmem [shape: f32[1,128], index: 3, kind: input, shape index: {}]
  %s4 = inlined_call_operand.vmem [shape: f32[1,128], index: 4, kind: input, shape index: {}]
  %s5 = inlined_call_operand.hbm [shape: f32[128,128], index: 5, kind: input, shape index: {}]
  %s6 = inlined_call_operand.vmem [shape: f32[1,128], index: 6, kind: input, shape index: {}]
  %s7 = inlined_call_operand.vmem [shape: f32[1,128], index: 7, kind: input, shape index: {}]
  %s8 = inlined_call_operand.vmem [shape: f32[1,128], index: 8, kind: input, shape index: {}]
  %s9 = inlined_call_operand.hbm [shape: f32[128,128], index: 9, kind: input, shape index: {}]
  %s10 = inlined_call_operand.vmem [shape: f32[1,128], index: 10, kind: input, shape index: {}]
  %s11 = inlined_call_operand.hbm [shape: f32[8,128], index: 11, kind: output, shape index: {}]
  %s12 = sld [smem:[#allocation0]]
  $region66: #{forward.1} parent=0
    _
  %s14 = ssub.s32 1, %s12
  %s15 = scalar_select 0, %s14, %s12
  $region1: #{forward.1} parent=0
    #allocation2 [shape = 'u8[65536]{0}', space=vmem, size = 0x10000, scoped, tag = 'input window, operand 1, single buffered']
    #allocation3 [shape = 's32[1]{0}', space=sflag, size = 0x4, scoped, tag = 'scoped memory for forward.1']
    #allocation4 [shape = 's32[1]{0}', space=sflag, size = 0x4, scoped, tag = 'scoped memory for forward.1']
    #allocation5 [shape = 'u8[65536]{0}', space=vmem, size = 0x10000, scoped, tag = 'input window, operand 5, single buffered']
    #allocation6 [shape = 's32[1]{0}', space=sflag, size = 0x4, scoped, tag = 'scoped memory for forward.1']
    #allocation7 [shape = 'u8[65536]{0}', space=vmem, size = 0x10000, scoped, tag = 'input window, operand 9, single buffered']
    #allocation8 [shape = 'u8[4096]{0}', space=vmem, size = 0x1000, scoped, tag = 'output window, operand 0, single buffered']
    %16 = vsyncpa [#allocation3], 0
    %17 = vsyncpa [#allocation6], 0
    %18 = vsyncpa [#allocation4], 0
    // Predicated region
    $region2: #{forward.1} parent=1 // pred_check
      _
    $region3: #{forward.1} parent=1 // pred_check_branch
      %20 = sbr.rel (0) target = $region5
    $region4: #{forward.1} parent=1 // pred_region
      _
    $region5: #{forward.1} parent=1 // pred_fallthru
      _
    // Predicated region
    $region6: #{forward.1} parent=1 // pred_check
      _
    $region7: #{forward.1} parent=1 // pred_check_branch
      %22 = sbr.rel (0) target = $region9
    $region8: #{forward.1} parent=1 // pred_region
      %s24 = ssub.s32 2048, 2048
      %25 = vsyncadd [#allocation3], %s24
      %s26 = sshll.u32 [#allocation2], 4
      %s27 = int_to_ptr.vmem [resolvable:$true] %s26
      %32 = dma.hbm_to_vmem [thread:$0]  %s1, 2048, %s27, [#allocation3], 128, 128, 8
    $region9: #{forward.1} parent=1 // pred_fallthru
      _
    // Predicated region
    $region10: #{forward.1} parent=1 // pred_check
      _
    $region11: #{forward.1} parent=1 // pred_check_branch
      %34 = sbr.rel (0) target = $region13
    $region12: #{forward.1} parent=1 // pred_region
      _
    $region13: #{forward.1} parent=1 // pred_fallthru
      _
    // Predicated region
    $region14: #{forward.1} parent=1 // pred_check
      _
    $region15: #{forward.1} parent=1 // pred_check_branch
      %36 = sbr.rel (0) target = $region17
    $region16: #{forward.1} parent=1 // pred_region
      _
    $region17: #{forward.1} parent=1 // pred_fallthru
      _
    // Predicated region
    $region18: #{forward.1} parent=1 // pred_check
      _
    $region19: #{forward.1} parent=1 // pred_check_branch
      %38 = sbr.rel (0) target = $region21
    $region20: #{forward.1} parent=1 // pred_region
      _
    $region21: #{forward.1} parent=1 // pred_fallthru
      _
    // Predicated region
    $region22: #{forward.1} parent=1 // pred_check
      _
    $region23: #{forward.1} parent=1 // pred_check_branch
      %40 = sbr.rel (0) target = $region25
    $region24: #{forward.1} parent=1 // pred_region
      %s42 = ssub.s32 2048, 2048
      %43 = vsyncadd [#allocation6], %s42
      %s44 = sshll.u32 [#allocation5], 4
      %s45 = int_to_ptr.vmem [resolvable:$true] %s44
      %50 = dma.hbm_to_vmem [thread:$0]  %s5, 2048, %s45, [#allocation6], 128, 128, 8
    $region25: #{forward.1} parent=1 // pred_fallthru
      _
    // Predicated region
    $region26: #{forward.1} parent=1 // pred_check
      _
    $region27: #{forward.1} parent=1 // pred_check_branch
      %52 = sbr.rel (0) target = $region29
    $region28: #{forward.1} parent=1 // pred_region
      _
    $region29: #{forward.1} parent=1 // pred_fallthru
      _
    // Predicated region
    $region30: #{forward.1} parent=1 // pred_check
      _
    $region31: #{forward.1} parent=1 // pred_check_branch
      %54 = sbr.rel (0) target = $region33
    $region32: #{forward.1} parent=1 // pred_region
      _
    $region33: #{forward.1} parent=1 // pred_fallthru
      _
    // Predicated region
    $region34: #{forward.1} parent=1 // pred_check
      _
    $region35: #{forward.1} parent=1 // pred_check_branch
      %56 = sbr.rel (0) target = $region37
    $region36: #{forward.1} parent=1 // pred_region
      _
    $region37: #{forward.1} parent=1 // pred_fallthru
      _
    // Predicated region
    $region38: #{forward.1} parent=1 // pred_check
      _
    $region39: #{forward.1} parent=1 // pred_check_branch
      %58 = sbr.rel (0) target = $region41
    $region40: #{forward.1} parent=1 // pred_region
      %s60 = ssub.s32 2048, 2048
      %61 = vsyncadd [#allocation6], %s60
      %s62 = sshll.u32 [#allocation7], 4
      %s63 = int_to_ptr.vmem [resolvable:$true] %s62
      %68 = dma.hbm_to_vmem [thread:$0]  %s9, 2048, %s63, [#allocation6], 128, 128, 8
    $region41: #{forward.1} parent=1 // pred_fallthru
      _
    // Predicated region
    $region42: #{forward.1} parent=1 // pred_check
      _
    $region43: #{forward.1} parent=1 // pred_check_branch
      %70 = sbr.rel (0) target = $region45
    $region44: #{forward.1} parent=1 // pred_region
      _
    $region45: #{forward.1} parent=1 // pred_fallthru
      _
    // Predicated region
    $region46: #{forward.1} parent=1 // pred_check
      _
    $region47: #{forward.1} parent=1 // pred_check_branch
      %72 = sbr.rel (0) target = $region49
    $region48: #{forward.1} parent=1 // pred_region
      %73 = dma.done [#allocation3], 2048
    $region49: #{forward.1} parent=1 // pred_fallthru
      _
    // Predicated region
    $region50: #{forward.1} parent=1 // pred_check
      _
    $region51: #{forward.1} parent=1 // pred_check_branch
      %75 = sbr.rel (0) target = $region53
    $region52: #{forward.1} parent=1 // pred_region
      %76 = dma.done [#allocation6], 2048
    $region53: #{forward.1} parent=1 // pred_fallthru
      _
    // Predicated region
    $region54: #{forward.1} parent=1 // pred_check
      _
    $region55: #{forward.1} parent=1 // pred_check_branch
      %78 = sbr.rel (0) target = $region57
    $region56: #{forward.1} parent=1 // pred_region
      %79 = dma.done [#allocation6], 2048
    $region57: #{forward.1} parent=1 // pred_fallthru
      _
    %v80 = vld [vmem:[%s0] sm:$0xff]
    %v81 = vld [vmem:[#allocation2] sm:$0xff]
    %v82 = vld [vmem:[#allocation2 + $0x8] sm:$0xff]
    %v83 = vld [vmem:[#allocation2 + $0x10] sm:$0xff]
    %v84 = vld [vmem:[#allocation2 + $0x18] sm:$0xff]
    %v85 = vld [vmem:[#allocation2 + $0x20] sm:$0xff]
    %v86 = vld [vmem:[#allocation2 + $0x28] sm:$0xff]
    %v87 = vld [vmem:[#allocation2 + $0x30] sm:$0xff]
    %v88 = vld [vmem:[#allocation2 + $0x38] sm:$0xff]
    %v89 = vld [vmem:[#allocation2 + $0x40] sm:$0xff]
    %v90 = vld [vmem:[#allocation2 + $0x48] sm:$0xff]
    %v91 = vld [vmem:[#allocation2 + $0x50] sm:$0xff]
    %v92 = vld [vmem:[#allocation2 + $0x58] sm:$0xff]
    %v93 = vld [vmem:[#allocation2 + $0x60] sm:$0xff]
    %v94 = vld [vmem:[#allocation2 + $0x68] sm:$0xff]
    %v95 = vld [vmem:[#allocation2 + $0x70] sm:$0xff]
    %v96 = vld [vmem:[#allocation2 + $0x78] sm:$0xff]
    %v97 = vld [vmem:[%s2] sm:$0x1]
    %v99 = vlaneseq
    %v100 = vshrl.u32 %v99, 7
    %v101 = vsub.s32 0, %v100
    %v102 = vrot.slane %v97, %v101
    %104 = vmatprep.subr.mxu0 0.0
    %105 = vmatpush1.msra.mxu0 %v81
    %106 = vmatprep.subr.mxu0 0.0
    %107 = vmatpush1.msra.mxu0 %v82
    %108 = vmatprep.subr.mxu0 0.0
    %109 = vmatpush1.msra.mxu0 %v83
    %110 = vmatprep.subr.mxu0 0.0
    %111 = vmatpush1.msra.mxu0 %v84
    %112 = vmatprep.subr.mxu0 0.0
    %113 = vmatpush1.msra.mxu0 %v85
    %114 = vmatprep.subr.mxu0 0.0
    %115 = vmatpush1.msra.mxu0 %v86
    %116 = vmatprep.subr.mxu0 0.0
    %117 = vmatpush1.msra.mxu0 %v87
    %118 = vmatprep.subr.mxu0 0.0
    %119 = vmatpush1.msra.mxu0 %v88
    %120 = vmatprep.subr.mxu0 0.0
    %121 = vmatpush1.msra.mxu0 %v89
    %122 = vmatprep.subr.mxu0 0.0
    %123 = vmatpush1.msra.mxu0 %v90
    %124 = vmatprep.subr.mxu0 0.0
    %125 = vmatpush1.msra.mxu0 %v91
    %126 = vmatprep.subr.mxu0 0.0
    %127 = vmatpush1.msra.mxu0 %v92
    %128 = vmatprep.subr.mxu0 0.0
    %129 = vmatpush1.msra.mxu0 %v93
    %130 = vmatprep.subr.mxu0 0.0
    %131 = vmatpush1.msra.mxu0 %v94
    %132 = vmatprep.subr.mxu0 0.0
    %133 = vmatpush1.msra.mxu0 %v95
    %134 = vmatprep.subr.mxu0 0.0
    %135 = vmatpush1.msra.mxu0 %v96
    %136 = vmatprep.subr.mxu0 0.0
    %137 = vmatpush1.msra.mxu0 0.0
    %138 = vmatprep.subr.mxu0 0.0
    %139 = vmatpush1.msra.mxu0 0.0
    %140 = vmatprep.subr.mxu0 0.0
    %141 = vmatpush1.msra.mxu0 0.0
    %142 = vmatprep.subr.mxu0 0.0
    %143 = vmatpush1.msra.mxu0 0.0
    %144 = vmatprep.subr.mxu0 0.0
    %145 = vmatpush1.msra.mxu0 0.0
    %146 = vmatprep.subr.mxu0 0.0
    %147 = vmatpush1.msra.mxu0 0.0
    %148 = vmatprep.subr.mxu0 0.0
    %149 = vmatpush1.msra.mxu0 0.0
    %150 = vmatprep.subr.mxu0 0.0
    %151 = vmatpush1.msra.mxu0 0.0
    %152 = vmatprep.subr.mxu0 0.0
    %153 = vmatpush1.msra.mxu0 0.0
    %154 = vmatprep.subr.mxu0 0.0
    %155 = vmatpush1.msra.mxu0 0.0
    %156 = vmatprep.subr.mxu0 0.0
    %157 = vmatpush1.msra.mxu0 0.0
    %158 = vmatprep.subr.mxu0 0.0
    %159 = vmatpush1.msra.mxu0 0.0
    %160 = vmatprep.subr.mxu0 0.0
    %161 = vmatpush1.msra.mxu0 0.0
    %162 = vmatprep.subr.mxu0 0.0
    %163 = vmatpush1.msra.mxu0 0.0
    %164 = vmatprep.subr.mxu0 0.0
    %165 = vmatpush1.msra.mxu0 0.0
    %166 = vmatprep.subr.mxu0 0.0
    %167 = vmatpush1.msra.mxu0 0.0
    %168 = vmatprep.mubr.f32.mxu0 0.0
    %169 = vmatmul.mubr.f32.gmra.mrb[0].mxu0 %v80
    %v170 = vpop.f32.mrb[0].mxu0
    %v171 = vadd.f32 %v102, %v170
    %v172 = vpop.f32.mrb[0].mxu0
    %173 = vdwg.mxu0
    %174 = vadd.xlane.f32.xlu0 %v171
    %v175 = vpop.xlane.xlu0 %174
    %v176 = vmul.f32 %v175, 0.015625
    %v177 = vmul.f32 %v171, %v171
    %178 = vadd.xlane.f32.xlu0 %v177
    %v179 = vpop.xlane.xlu0 %178
    %v180 = vmul.f32 %v179, 0.015625
    %v181 = vmul.f32 %v176, %v176
    %v182 = vsub.f32 %v180, %v181
    %v183 = vmax.f32 %v182, 0.0
    %v184 = vsub.f32 %v171, %v176
    %v185 = vadd.f32 %v183, 1e-05
    %v186 = vrsqrt.pop %v185
    %v187 = vmul.f32 %v184, %v186
    %v188 = vld [vmem:[%s3] sm:$0x1]
    %v190 = vlaneseq
    %v191 = vshrl.u32 %v190, 7
    %v192 = vsub.s32 0, %v191
    %v193 = vrot.slane %v188, %v192
    %v195 = vmul.f32 %v187, %v193
    %v196 = vld [vmem:[%s4] sm:$0x1]
    %v198 = vlaneseq
    %v199 = vshrl.u32 %v198, 7
    %v200 = vsub.s32 0, %v199
    %v201 = vrot.slane %v196, %v200
    %v203 = vadd.f32 %v195, %v201
    %v204 = vmul.f32 %v203, 0.01
    %v205 = vmax.f32 %v203, %v204
    %v206 = vld [vmem:[#allocation5] sm:$0xff]
    %v207 = vld [vmem:[#allocation5 + $0x8] sm:$0xff]
    %v208 = vld [vmem:[#allocation5 + $0x10] sm:$0xff]
    %v209 = vld [vmem:[#allocation5 + $0x18] sm:$0xff]
    %v210 = vld [vmem:[#allocation5 + $0x20] sm:$0xff]
    %v211 = vld [vmem:[#allocation5 + $0x28] sm:$0xff]
    %v212 = vld [vmem:[#allocation5 + $0x30] sm:$0xff]
    %v213 = vld [vmem:[#allocation5 + $0x38] sm:$0xff]
    %v214 = vld [vmem:[#allocation5 + $0x40] sm:$0xff]
    %v215 = vld [vmem:[#allocation5 + $0x48] sm:$0xff]
    %v216 = vld [vmem:[#allocation5 + $0x50] sm:$0xff]
    %v217 = vld [vmem:[#allocation5 + $0x58] sm:$0xff]
    %v218 = vld [vmem:[#allocation5 + $0x60] sm:$0xff]
    %v219 = vld [vmem:[#allocation5 + $0x68] sm:$0xff]
    %v220 = vld [vmem:[#allocation5 + $0x70] sm:$0xff]
    %v221 = vld [vmem:[#allocation5 + $0x78] sm:$0xff]
    %v222 = vld [vmem:[%s6] sm:$0x1]
    %v224 = vlaneseq
    %v225 = vshrl.u32 %v224, 7
    %v226 = vsub.s32 0, %v225
    %v227 = vrot.slane %v222, %v226
    %229 = vmatprep.subr.mxu0 0.0
    %230 = vmatpush1.msra.mxu0 %v206
    %231 = vmatprep.subr.mxu0 0.0
    %232 = vmatpush1.msra.mxu0 %v207
    %233 = vmatprep.subr.mxu0 0.0
    %234 = vmatpush1.msra.mxu0 %v208
    %235 = vmatprep.subr.mxu0 0.0
    %236 = vmatpush1.msra.mxu0 %v209
    %237 = vmatprep.subr.mxu0 0.0
    %238 = vmatpush1.msra.mxu0 %v210
    %239 = vmatprep.subr.mxu0 0.0
    %240 = vmatpush1.msra.mxu0 %v211
    %241 = vmatprep.subr.mxu0 0.0
    %242 = vmatpush1.msra.mxu0 %v212
    %243 = vmatprep.subr.mxu0 0.0
    %244 = vmatpush1.msra.mxu0 %v213
    %245 = vmatprep.subr.mxu0 0.0
    %246 = vmatpush1.msra.mxu0 %v214
    %247 = vmatprep.subr.mxu0 0.0
    %248 = vmatpush1.msra.mxu0 %v215
    %249 = vmatprep.subr.mxu0 0.0
    %250 = vmatpush1.msra.mxu0 %v216
    %251 = vmatprep.subr.mxu0 0.0
    %252 = vmatpush1.msra.mxu0 %v217
    %253 = vmatprep.subr.mxu0 0.0
    %254 = vmatpush1.msra.mxu0 %v218
    %255 = vmatprep.subr.mxu0 0.0
    %256 = vmatpush1.msra.mxu0 %v219
    %257 = vmatprep.subr.mxu0 0.0
    %258 = vmatpush1.msra.mxu0 %v220
    %259 = vmatprep.subr.mxu0 0.0
    %260 = vmatpush1.msra.mxu0 %v221
    %261 = vmatprep.subr.mxu0 0.0
    %262 = vmatpush1.msra.mxu0 0.0
    %263 = vmatprep.subr.mxu0 0.0
    %264 = vmatpush1.msra.mxu0 0.0
    %265 = vmatprep.subr.mxu0 0.0
    %266 = vmatpush1.msra.mxu0 0.0
    %267 = vmatprep.subr.mxu0 0.0
    %268 = vmatpush1.msra.mxu0 0.0
    %269 = vmatprep.subr.mxu0 0.0
    %270 = vmatpush1.msra.mxu0 0.0
    %271 = vmatprep.subr.mxu0 0.0
    %272 = vmatpush1.msra.mxu0 0.0
    %273 = vmatprep.subr.mxu0 0.0
    %274 = vmatpush1.msra.mxu0 0.0
    %275 = vmatprep.subr.mxu0 0.0
    %276 = vmatpush1.msra.mxu0 0.0
    %277 = vmatprep.subr.mxu0 0.0
    %278 = vmatpush1.msra.mxu0 0.0
    %279 = vmatprep.subr.mxu0 0.0
    %280 = vmatpush1.msra.mxu0 0.0
    %281 = vmatprep.subr.mxu0 0.0
    %282 = vmatpush1.msra.mxu0 0.0
    %283 = vmatprep.subr.mxu0 0.0
    %284 = vmatpush1.msra.mxu0 0.0
    %285 = vmatprep.subr.mxu0 0.0
    %286 = vmatpush1.msra.mxu0 0.0
    %287 = vmatprep.subr.mxu0 0.0
    %288 = vmatpush1.msra.mxu0 0.0
    %289 = vmatprep.subr.mxu0 0.0
    %290 = vmatpush1.msra.mxu0 0.0
    %291 = vmatprep.subr.mxu0 0.0
    %292 = vmatpush1.msra.mxu0 0.0
    %293 = vmatprep.mubr.f32.mxu0 0.0
    %294 = vmatmul.mubr.f32.gmra.mrb[0].mxu0 %v205
    %v295 = vpop.f32.mrb[0].mxu0
    %v296 = vadd.f32 %v227, %v295
    %v297 = vpop.f32.mrb[0].mxu0
    %298 = vdwg.mxu0
    %299 = vadd.xlane.f32.xlu0 %v296
    %v300 = vpop.xlane.xlu0 %299
    %v301 = vmul.f32 %v300, 0.03125
    %v302 = vmul.f32 %v296, %v296
    %303 = vadd.xlane.f32.xlu0 %v302
    %v304 = vpop.xlane.xlu0 %303
    %v305 = vmul.f32 %v304, 0.03125
    %v306 = vmul.f32 %v301, %v301
    %v307 = vsub.f32 %v305, %v306
    %v308 = vmax.f32 %v307, 0.0
    %v309 = vsub.f32 %v296, %v301
    %v310 = vadd.f32 %v308, 1e-05
    %v311 = vrsqrt.pop %v310
    %v312 = vmul.f32 %v309, %v311
    %v313 = vld [vmem:[%s7] sm:$0x1]
    %v315 = vlaneseq
    %v316 = vshrl.u32 %v315, 7
    %v317 = vsub.s32 0, %v316
    %v318 = vrot.slane %v313, %v317
    %v320 = vmul.f32 %v312, %v318
    %v321 = vld [vmem:[%s8] sm:$0x1]
    %v323 = vlaneseq
    %v324 = vshrl.u32 %v323, 7
    %v325 = vsub.s32 0, %v324
    %v326 = vrot.slane %v321, %v325
    %v328 = vadd.f32 %v320, %v326
    %v329 = vmul.f32 %v328, 0.01
    %v330 = vmax.f32 %v328, %v329
    %v331 = vld [vmem:[#allocation7] sm:$0xff]
    %v332 = vld [vmem:[#allocation7 + $0x8] sm:$0xff]
    %v333 = vld [vmem:[#allocation7 + $0x10] sm:$0xff]
    %v334 = vld [vmem:[#allocation7 + $0x18] sm:$0xff]
    %v335 = vld [vmem:[#allocation7 + $0x20] sm:$0xff]
    %v336 = vld [vmem:[#allocation7 + $0x28] sm:$0xff]
    %v337 = vld [vmem:[#allocation7 + $0x30] sm:$0xff]
    %v338 = vld [vmem:[#allocation7 + $0x38] sm:$0xff]
    %v339 = vld [vmem:[#allocation7 + $0x40] sm:$0xff]
    %v340 = vld [vmem:[#allocation7 + $0x48] sm:$0xff]
    %v341 = vld [vmem:[#allocation7 + $0x50] sm:$0xff]
    %v342 = vld [vmem:[#allocation7 + $0x58] sm:$0xff]
    %v343 = vld [vmem:[#allocation7 + $0x60] sm:$0xff]
    %v344 = vld [vmem:[#allocation7 + $0x68] sm:$0xff]
    %v345 = vld [vmem:[#allocation7 + $0x70] sm:$0xff]
    %v346 = vld [vmem:[#allocation7 + $0x78] sm:$0xff]
    %v347 = vld [vmem:[%s10] sm:$0x1]
    %v349 = vlaneseq
    %v350 = vshrl.u32 %v349, 7
    %v351 = vsub.s32 0, %v350
    %v352 = vrot.slane %v347, %v351
    %354 = vmatprep.subr.mxu0 0.0
    %355 = vmatpush1.msra.mxu0 %v331
    %356 = vmatprep.subr.mxu0 0.0
    %357 = vmatpush1.msra.mxu0 %v332
    %358 = vmatprep.subr.mxu0 0.0
    %359 = vmatpush1.msra.mxu0 %v333
    %360 = vmatprep.subr.mxu0 0.0
    %361 = vmatpush1.msra.mxu0 %v334
    %362 = vmatprep.subr.mxu0 0.0
    %363 = vmatpush1.msra.mxu0 %v335
    %364 = vmatprep.subr.mxu0 0.0
    %365 = vmatpush1.msra.mxu0 %v336
    %366 = vmatprep.subr.mxu0 0.0
    %367 = vmatpush1.msra.mxu0 %v337
    %368 = vmatprep.subr.mxu0 0.0
    %369 = vmatpush1.msra.mxu0 %v338
    %370 = vmatprep.subr.mxu0 0.0
    %371 = vmatpush1.msra.mxu0 %v339
    %372 = vmatprep.subr.mxu0 0.0
    %373 = vmatpush1.msra.mxu0 %v340
    %374 = vmatprep.subr.mxu0 0.0
    %375 = vmatpush1.msra.mxu0 %v341
    %376 = vmatprep.subr.mxu0 0.0
    %377 = vmatpush1.msra.mxu0 %v342
    %378 = vmatprep.subr.mxu0 0.0
    %379 = vmatpush1.msra.mxu0 %v343
    %380 = vmatprep.subr.mxu0 0.0
    %381 = vmatpush1.msra.mxu0 %v344
    %382 = vmatprep.subr.mxu0 0.0
    %383 = vmatpush1.msra.mxu0 %v345
    %384 = vmatprep.subr.mxu0 0.0
    %385 = vmatpush1.msra.mxu0 %v346
    %386 = vmatprep.subr.mxu0 0.0
    %387 = vmatpush1.msra.mxu0 0.0
    %388 = vmatprep.subr.mxu0 0.0
    %389 = vmatpush1.msra.mxu0 0.0
    %390 = vmatprep.subr.mxu0 0.0
    %391 = vmatpush1.msra.mxu0 0.0
    %392 = vmatprep.subr.mxu0 0.0
    %393 = vmatpush1.msra.mxu0 0.0
    %394 = vmatprep.subr.mxu0 0.0
    %395 = vmatpush1.msra.mxu0 0.0
    %396 = vmatprep.subr.mxu0 0.0
    %397 = vmatpush1.msra.mxu0 0.0
    %398 = vmatprep.subr.mxu0 0.0
    %399 = vmatpush1.msra.mxu0 0.0
    %400 = vmatprep.subr.mxu0 0.0
    %401 = vmatpush1.msra.mxu0 0.0
    %402 = vmatprep.subr.mxu0 0.0
    %403 = vmatpush1.msra.mxu0 0.0
    %404 = vmatprep.subr.mxu0 0.0
    %405 = vmatpush1.msra.mxu0 0.0
    %406 = vmatprep.subr.mxu0 0.0
    %407 = vmatpush1.msra.mxu0 0.0
    %408 = vmatprep.subr.mxu0 0.0
    %409 = vmatpush1.msra.mxu0 0.0
    %410 = vmatprep.subr.mxu0 0.0
    %411 = vmatpush1.msra.mxu0 0.0
    %412 = vmatprep.subr.mxu0 0.0
    %413 = vmatpush1.msra.mxu0 0.0
    %414 = vmatprep.subr.mxu0 0.0
    %415 = vmatpush1.msra.mxu0 0.0
    %416 = vmatprep.subr.mxu0 0.0
    %417 = vmatpush1.msra.mxu0 0.0
    %418 = vmatprep.mubr.f32.mxu0 0.0
    %419 = vmatmul.mubr.f32.gmra.mrb[0].mxu0 %v330
    %v420 = vpop.f32.mrb[0].mxu0
    %v421 = vadd.f32 %v352, %v420
    %v422 = vpop.f32.mrb[0].mxu0
    %423 = vdwg.mxu0
    %424 = vst [vmem:[#allocation8] sm:$0xff] %v421
    // Predicated region
    $region58: #{forward.1} parent=1 // pred_check
      _
    $region59: #{forward.1} parent=1 // pred_check_branch
      %426 = sbr.rel (0) target = $region61
    $region60: #{forward.1} parent=1 // pred_region
      %s428 = ssub.s32 128, 128
      %429 = vsyncadd [#allocation4], %s428
      %s431 = sshll.u32 [#allocation8], 4
      %s432 = int_to_ptr.vmem [resolvable:$true] %s431
      %434 = dma.vmem_to_hbm [thread:$0]  %s432, 128, %s11, [#allocation4]
    $region61: #{forward.1} parent=1 // pred_fallthru
      _
    // Predicated region
    $region62: #{forward.1} parent=1 // pred_check
      _
    $region63: #{forward.1} parent=1 // pred_check_branch
      %436 = sbr.rel (0) target = $region65
    $region64: #{forward.1} parent=1 // pred_region
      %437 = dma.done [#allocation4], 128
    $region65: #{forward.1} parent=1 // pred_fallthru
      _
    %438 = vsyncpa [#allocation3], 1
    %439 = vsyncpa [#allocation6], 1
    %440 = vsyncpa [#allocation4], 1

// kernel: forward.1
$region0: #{forward.1}
  #allocation0 [shape = 'u32[]', space=smem, size = 0x4, offset = 0x4, fixed_abs, tag = 'smem constant byte address 0x4 - core index']
  #allocation1 [shape = 'u32[144,128]{1,0:T(1,128)}', space=vmem, size = 0x12000, scoped, tag = 'internal scratch']
  %s0 = inlined_call_operand.vmem [shape: f32[8,128], index: 0, kind: input, shape index: {}]
  %s1 = inlined_call_operand.hbm [shape: f32[128,128], index: 1, kind: input, shape index: {}]
  %s2 = inlined_call_operand.vmem [shape: f32[1,128], index: 2, kind: input, shape index: {}]
  %s3 = inlined_call_operand.vmem [shape: f32[1,128], index: 3, kind: input, shape index: {}]
  %s4 = inlined_call_operand.vmem [shape: f32[1,128], index: 4, kind: input, shape index: {}]
  %s5 = inlined_call_operand.hbm [shape: f32[128,128], index: 5, kind: input, shape index: {}]
  %s6 = inlined_call_operand.vmem [shape: f32[1,128], index: 6, kind: input, shape index: {}]
  %s7 = inlined_call_operand.vmem [shape: f32[1,128], index: 7, kind: input, shape index: {}]
  %s8 = inlined_call_operand.vmem [shape: f32[1,128], index: 8, kind: input, shape index: {}]
  %s9 = inlined_call_operand.hbm [shape: f32[128,128], index: 9, kind: input, shape index: {}]
  %s10 = inlined_call_operand.vmem [shape: f32[1,128], index: 10, kind: input, shape index: {}]
  %s11 = inlined_call_operand.hbm [shape: f32[8,128], index: 11, kind: output, shape index: {}]
  %s12 = sld [smem:[#allocation0]]
  $region66: #{forward.1} parent=0
    _
  %s14 = ssub.s32 1, %s12
  %s15 = scalar_select 0, %s14, %s12
  $region1: #{forward.1} parent=0
    #allocation2 [shape = 'u8[65536]{0}', space=vmem, size = 0x10000, scoped, tag = 'input window, operand 1, single buffered']
    #allocation3 [shape = 's32[1]{0}', space=sflag, size = 0x4, scoped, tag = 'scoped memory for forward.1']
    #allocation4 [shape = 's32[1]{0}', space=sflag, size = 0x4, scoped, tag = 'scoped memory for forward.1']
    #allocation5 [shape = 'u8[65536]{0}', space=vmem, size = 0x10000, scoped, tag = 'input window, operand 5, single buffered']
    #allocation6 [shape = 's32[1]{0}', space=sflag, size = 0x4, scoped, tag = 'scoped memory for forward.1']
    #allocation7 [shape = 'u8[65536]{0}', space=vmem, size = 0x10000, scoped, tag = 'input window, operand 9, single buffered']
    #allocation8 [shape = 'u8[4096]{0}', space=vmem, size = 0x1000, scoped, tag = 'output window, operand 0, single buffered']
    %16 = vsyncpa [#allocation3], 0
    %17 = vsyncpa [#allocation6], 0
    %18 = vsyncpa [#allocation4], 0
    // Predicated region
    $region2: #{forward.1} parent=1 // pred_check
      _
    $region3: #{forward.1} parent=1 // pred_check_branch
      %20 = sbr.rel (0) target = $region5
    $region4: #{forward.1} parent=1 // pred_region
      _
    $region5: #{forward.1} parent=1 // pred_fallthru
      _
    // Predicated region
    $region6: #{forward.1} parent=1 // pred_check
      _
    $region7: #{forward.1} parent=1 // pred_check_branch
      %22 = sbr.rel (0) target = $region9
    $region8: #{forward.1} parent=1 // pred_region
      %s24 = ssub.s32 2048, 2048
      %25 = vsyncadd [#allocation3], %s24
      %s26 = sshll.u32 [#allocation2], 4
      %s27 = int_to_ptr.vmem [resolvable:$true] %s26
      %32 = dma.hbm_to_vmem [thread:$0]  %s1, 2048, %s27, [#allocation3], 128, 128, 8
    $region9: #{forward.1} parent=1 // pred_fallthru
      _
    // Predicated region
    $region10: #{forward.1} parent=1 // pred_check
      _
    $region11: #{forward.1} parent=1 // pred_check_branch
      %34 = sbr.rel (0) target = $region13
    $region12: #{forward.1} parent=1 // pred_region
      _
    $region13: #{forward.1} parent=1 // pred_fallthru
      _
    // Predicated region
    $region14: #{forward.1} parent=1 // pred_check
      _
    $region15: #{forward.1} parent=1 // pred_check_branch
      %36 = sbr.rel (0) target = $region17
    $region16: #{forward.1} parent=1 // pred_region
      _
    $region17: #{forward.1} parent=1 // pred_fallthru
      _
    // Predicated region
    $region18: #{forward.1} parent=1 // pred_check
      _
    $region19: #{forward.1} parent=1 // pred_check_branch
      %38 = sbr.rel (0) target = $region21
    $region20: #{forward.1} parent=1 // pred_region
      _
    $region21: #{forward.1} parent=1 // pred_fallthru
      _
    // Predicated region
    $region22: #{forward.1} parent=1 // pred_check
      _
    $region23: #{forward.1} parent=1 // pred_check_branch
      %40 = sbr.rel (0) target = $region25
    $region24: #{forward.1} parent=1 // pred_region
      %s42 = ssub.s32 2048, 2048
      %43 = vsyncadd [#allocation6], %s42
      %s44 = sshll.u32 [#allocation5], 4
      %s45 = int_to_ptr.vmem [resolvable:$true] %s44
      %50 = dma.hbm_to_vmem [thread:$0]  %s5, 2048, %s45, [#allocation6], 128, 128, 8
    $region25: #{forward.1} parent=1 // pred_fallthru
      _
    // Predicated region
    $region26: #{forward.1} parent=1 // pred_check
      _
    $region27: #{forward.1} parent=1 // pred_check_branch
      %52 = sbr.rel (0) target = $region29
    $region28: #{forward.1} parent=1 // pred_region
      _
    $region29: #{forward.1} parent=1 // pred_fallthru
      _
    // Predicated region
    $region30: #{forward.1} parent=1 // pred_check
      _
    $region31: #{forward.1} parent=1 // pred_check_branch
      %54 = sbr.rel (0) target = $region33
    $region32: #{forward.1} parent=1 // pred_region
      _
    $region33: #{forward.1} parent=1 // pred_fallthru
      _
    // Predicated region
    $region34: #{forward.1} parent=1 // pred_check
      _
    $region35: #{forward.1} parent=1 // pred_check_branch
      %56 = sbr.rel (0) target = $region37
    $region36: #{forward.1} parent=1 // pred_region
      _
    $region37: #{forward.1} parent=1 // pred_fallthru
      _
    // Predicated region
    $region38: #{forward.1} parent=1 // pred_check
      _
    $region39: #{forward.1} parent=1 // pred_check_branch
      %58 = sbr.rel (0) target = $region41
    $region40: #{forward.1} parent=1 // pred_region
      %s60 = ssub.s32 2048, 2048
      %61 = vsyncadd [#allocation6], %s60
      %s62 = sshll.u32 [#allocation7], 4
      %s63 = int_to_ptr.vmem [resolvable:$true] %s62
      %68 = dma.hbm_to_vmem [thread:$0]  %s9, 2048, %s63, [#allocation6], 128, 128, 8
    $region41: #{forward.1} parent=1 // pred_fallthru
      _
    // Predicated region
    $region42: #{forward.1} parent=1 // pred_check
      _
    $region43: #{forward.1} parent=1 // pred_check_branch
      %70 = sbr.rel (0) target = $region45
    $region44: #{forward.1} parent=1 // pred_region
      _
    $region45: #{forward.1} parent=1 // pred_fallthru
      _
    // Predicated region
    $region46: #{forward.1} parent=1 // pred_check
      _
    $region47: #{forward.1} parent=1 // pred_check_branch
      %72 = sbr.rel (0) target = $region49
    $region48: #{forward.1} parent=1 // pred_region
      %73 = dma.done [#allocation3], 2048
    $region49: #{forward.1} parent=1 // pred_fallthru
      _
    // Predicated region
    $region50: #{forward.1} parent=1 // pred_check
      _
    $region51: #{forward.1} parent=1 // pred_check_branch
      %75 = sbr.rel (0) target = $region53
    $region52: #{forward.1} parent=1 // pred_region
      %76 = dma.done [#allocation6], 2048
    $region53: #{forward.1} parent=1 // pred_fallthru
      _
    // Predicated region
    $region54: #{forward.1} parent=1 // pred_check
      _
    $region55: #{forward.1} parent=1 // pred_check_branch
      %78 = sbr.rel (0) target = $region57
    $region56: #{forward.1} parent=1 // pred_region
      %79 = dma.done [#allocation6], 2048
    $region57: #{forward.1} parent=1 // pred_fallthru
      _
    %v80 = vld [vmem:[%s0] sm:$0xff]
    %v81 = vld [vmem:[#allocation2] sm:$0xff]
    %v82 = vld [vmem:[#allocation2 + $0x8] sm:$0xff]
    %v83 = vld [vmem:[#allocation2 + $0x10] sm:$0xff]
    %v84 = vld [vmem:[#allocation2 + $0x18] sm:$0xff]
    %v85 = vld [vmem:[#allocation2 + $0x20] sm:$0xff]
    %v86 = vld [vmem:[#allocation2 + $0x28] sm:$0xff]
    %v87 = vld [vmem:[#allocation2 + $0x30] sm:$0xff]
    %v88 = vld [vmem:[#allocation2 + $0x38] sm:$0xff]
    %v89 = vld [vmem:[#allocation2 + $0x40] sm:$0xff]
    %v90 = vld [vmem:[#allocation2 + $0x48] sm:$0xff]
    %v91 = vld [vmem:[#allocation2 + $0x50] sm:$0xff]
    %v92 = vld [vmem:[#allocation2 + $0x58] sm:$0xff]
    %v93 = vld [vmem:[#allocation2 + $0x60] sm:$0xff]
    %v94 = vld [vmem:[#allocation2 + $0x68] sm:$0xff]
    %v95 = vld [vmem:[#allocation2 + $0x70] sm:$0xff]
    %v96 = vld [vmem:[#allocation2 + $0x78] sm:$0xff]
    %v97 = vld [vmem:[%s2] sm:$0x1]
    %v99 = vlaneseq
    %v100 = vshrl.u32 %v99, 7
    %v101 = vsub.s32 0, %v100
    %v102 = vrot.slane %v97, %v101
    %104 = vmatprep.subr.mxu0 0.0
    %105 = vmatpush1.msra.mxu0 %v81
    %106 = vmatprep.subr.mxu0 0.0
    %107 = vmatpush1.msra.mxu0 %v82
    %108 = vmatprep.subr.mxu0 0.0
    %109 = vmatpush1.msra.mxu0 %v83
    %110 = vmatprep.subr.mxu0 0.0
    %111 = vmatpush1.msra.mxu0 %v84
    %112 = vmatprep.subr.mxu0 0.0
    %113 = vmatpush1.msra.mxu0 %v85
    %114 = vmatprep.subr.mxu0 0.0
    %115 = vmatpush1.msra.mxu0 %v86
    %116 = vmatprep.subr.mxu0 0.0
    %117 = vmatpush1.msra.mxu0 %v87
    %118 = vmatprep.subr.mxu0 0.0
    %119 = vmatpush1.msra.mxu0 %v88
    %120 = vmatprep.subr.mxu0 0.0
    %121 = vmatpush1.msra.mxu0 %v89
    %122 = vmatprep.subr.mxu0 0.0
    %123 = vmatpush1.msra.mxu0 %v90
    %124 = vmatprep.subr.mxu0 0.0
    %125 = vmatpush1.msra.mxu0 %v91
    %126 = vmatprep.subr.mxu0 0.0
    %127 = vmatpush1.msra.mxu0 %v92
    %128 = vmatprep.subr.mxu0 0.0
    %129 = vmatpush1.msra.mxu0 %v93
    %130 = vmatprep.subr.mxu0 0.0
    %131 = vmatpush1.msra.mxu0 %v94
    %132 = vmatprep.subr.mxu0 0.0
    %133 = vmatpush1.msra.mxu0 %v95
    %134 = vmatprep.subr.mxu0 0.0
    %135 = vmatpush1.msra.mxu0 %v96
    %136 = vmatprep.subr.mxu0 0.0
    %137 = vmatpush1.msra.mxu0 0.0
    %138 = vmatprep.subr.mxu0 0.0
    %139 = vmatpush1.msra.mxu0 0.0
    %140 = vmatprep.subr.mxu0 0.0
    %141 = vmatpush1.msra.mxu0 0.0
    %142 = vmatprep.subr.mxu0 0.0
    %143 = vmatpush1.msra.mxu0 0.0
    %144 = vmatprep.subr.mxu0 0.0
    %145 = vmatpush1.msra.mxu0 0.0
    %146 = vmatprep.subr.mxu0 0.0
    %147 = vmatpush1.msra.mxu0 0.0
    %148 = vmatprep.subr.mxu0 0.0
    %149 = vmatpush1.msra.mxu0 0.0
    %150 = vmatprep.subr.mxu0 0.0
    %151 = vmatpush1.msra.mxu0 0.0
    %152 = vmatprep.subr.mxu0 0.0
    %153 = vmatpush1.msra.mxu0 0.0
    %154 = vmatprep.subr.mxu0 0.0
    %155 = vmatpush1.msra.mxu0 0.0
    %156 = vmatprep.subr.mxu0 0.0
    %157 = vmatpush1.msra.mxu0 0.0
    %158 = vmatprep.subr.mxu0 0.0
    %159 = vmatpush1.msra.mxu0 0.0
    %160 = vmatprep.subr.mxu0 0.0
    %161 = vmatpush1.msra.mxu0 0.0
    %162 = vmatprep.subr.mxu0 0.0
    %163 = vmatpush1.msra.mxu0 0.0
    %164 = vmatprep.subr.mxu0 0.0
    %165 = vmatpush1.msra.mxu0 0.0
    %166 = vmatprep.subr.mxu0 0.0
    %167 = vmatpush1.msra.mxu0 0.0
    %168 = vmatprep.mubr.f32.mxu0 0.0
    %169 = vmatmul.mubr.f32.gmra.mrb[0].mxu0 %v80
    %v170 = vpop.f32.mrb[0].mxu0
    %v171 = vadd.f32 %v102, %v170
    %v172 = vpop.f32.mrb[0].mxu0
    %173 = vdwg.mxu0
    %174 = vadd.xlane.f32.xlu0 %v171
    %v175 = vpop.xlane.xlu0 %174
    %v176 = vmul.f32 %v175, 0.015625
    %v177 = vmul.f32 %v171, %v171
    %178 = vadd.xlane.f32.xlu0 %v177
    %v179 = vpop.xlane.xlu0 %178
    %v180 = vmul.f32 %v179, 0.015625
    %v181 = vmul.f32 %v176, %v176
    %v182 = vsub.f32 %v180, %v181
    %v183 = vmax.f32 %v182, 0.0
    %v184 = vsub.f32 %v171, %v176
    %v185 = vadd.f32 %v183, 1e-05
    %v186 = vrsqrt.pop %v185
    %v187 = vmul.f32 %v184, %v186
    %v188 = vld [vmem:[%s3] sm:$0x1]
    %v190 = vlaneseq
    %v191 = vshrl.u32 %v190, 7
    %v192 = vsub.s32 0, %v191
    %v193 = vrot.slane %v188, %v192
    %v195 = vmul.f32 %v187, %v193
    %v196 = vld [vmem:[%s4] sm:$0x1]
    %v198 = vlaneseq
    %v199 = vshrl.u32 %v198, 7
    %v200 = vsub.s32 0, %v199
    %v201 = vrot.slane %v196, %v200
    %v203 = vadd.f32 %v195, %v201
    %v204 = vmul.f32 %v203, 0.01
    %v205 = vmax.f32 %v203, %v204
    %v206 = vld [vmem:[#allocation5] sm:$0xff]
    %v207 = vld [vmem:[#allocation5 + $0x8] sm:$0xff]
    %v208 = vld [vmem:[#allocation5 + $0x10] sm:$0xff]
    %v209 = vld [vmem:[#allocation5 + $0x18] sm:$0xff]
    %v210 = vld [vmem:[#allocation5 + $0x20] sm:$0xff]
    %v211 = vld [vmem:[#allocation5 + $0x28] sm:$0xff]
    %v212 = vld [vmem:[#allocation5 + $0x30] sm:$0xff]
    %v213 = vld [vmem:[#allocation5 + $0x38] sm:$0xff]
    %v214 = vld [vmem:[#allocation5 + $0x40] sm:$0xff]
    %v215 = vld [vmem:[#allocation5 + $0x48] sm:$0xff]
    %v216 = vld [vmem:[#allocation5 + $0x50] sm:$0xff]
    %v217 = vld [vmem:[#allocation5 + $0x58] sm:$0xff]
    %v218 = vld [vmem:[#allocation5 + $0x60] sm:$0xff]
    %v219 = vld [vmem:[#allocation5 + $0x68] sm:$0xff]
    %v220 = vld [vmem:[#allocation5 + $0x70] sm:$0xff]
    %v221 = vld [vmem:[#allocation5 + $0x78] sm:$0xff]
    %v222 = vld [vmem:[%s6] sm:$0x1]
    %v224 = vlaneseq
    %v225 = vshrl.u32 %v224, 7
    %v226 = vsub.s32 0, %v225
    %v227 = vrot.slane %v222, %v226
    %229 = vmatprep.subr.mxu0 0.0
    %230 = vmatpush1.msra.mxu0 %v206
    %231 = vmatprep.subr.mxu0 0.0
    %232 = vmatpush1.msra.mxu0 %v207
    %233 = vmatprep.subr.mxu0 0.0
    %234 = vmatpush1.msra.mxu0 %v208
    %235 = vmatprep.subr.mxu0 0.0
    %236 = vmatpush1.msra.mxu0 %v209
    %237 = vmatprep.subr.mxu0 0.0
    %238 = vmatpush1.msra.mxu0 %v210
    %239 = vmatprep.subr.mxu0 0.0
    %240 = vmatpush1.msra.mxu0 %v211
    %241 = vmatprep.subr.mxu0 0.0
    %242 = vmatpush1.msra.mxu0 %v212
    %243 = vmatprep.subr.mxu0 0.0
    %244 = vmatpush1.msra.mxu0 %v213
    %245 = vmatprep.subr.mxu0 0.0
    %246 = vmatpush1.msra.mxu0 %v214
    %247 = vmatprep.subr.mxu0 0.0
    %248 = vmatpush1.msra.mxu0 %v215
    %249 = vmatprep.subr.mxu0 0.0
    %250 = vmatpush1.msra.mxu0 %v216
    %251 = vmatprep.subr.mxu0 0.0
    %252 = vmatpush1.msra.mxu0 %v217
    %253 = vmatprep.subr.mxu0 0.0
    %254 = vmatpush1.msra.mxu0 %v218
    %255 = vmatprep.subr.mxu0 0.0
    %256 = vmatpush1.msra.mxu0 %v219
    %257 = vmatprep.subr.mxu0 0.0
    %258 = vmatpush1.msra.mxu0 %v220
    %259 = vmatprep.subr.mxu0 0.0
    %260 = vmatpush1.msra.mxu0 %v221
    %261 = vmatprep.subr.mxu0 0.0
    %262 = vmatpush1.msra.mxu0 0.0
    %263 = vmatprep.subr.mxu0 0.0
    %264 = vmatpush1.msra.mxu0 0.0
    %265 = vmatprep.subr.mxu0 0.0
    %266 = vmatpush1.msra.mxu0 0.0
    %267 = vmatprep.subr.mxu0 0.0
    %268 = vmatpush1.msra.mxu0 0.0
    %269 = vmatprep.subr.mxu0 0.0
    %270 = vmatpush1.msra.mxu0 0.0
    %271 = vmatprep.subr.mxu0 0.0
    %272 = vmatpush1.msra.mxu0 0.0
    %273 = vmatprep.subr.mxu0 0.0
    %274 = vmatpush1.msra.mxu0 0.0
    %275 = vmatprep.subr.mxu0 0.0
    %276 = vmatpush1.msra.mxu0 0.0
    %277 = vmatprep.subr.mxu0 0.0
    %278 = vmatpush1.msra.mxu0 0.0
    %279 = vmatprep.subr.mxu0 0.0
    %280 = vmatpush1.msra.mxu0 0.0
    %281 = vmatprep.subr.mxu0 0.0
    %282 = vmatpush1.msra.mxu0 0.0
    %283 = vmatprep.subr.mxu0 0.0
    %284 = vmatpush1.msra.mxu0 0.0
    %285 = vmatprep.subr.mxu0 0.0
    %286 = vmatpush1.msra.mxu0 0.0
    %287 = vmatprep.subr.mxu0 0.0
    %288 = vmatpush1.msra.mxu0 0.0
    %289 = vmatprep.subr.mxu0 0.0
    %290 = vmatpush1.msra.mxu0 0.0
    %291 = vmatprep.subr.mxu0 0.0
    %292 = vmatpush1.msra.mxu0 0.0
    %293 = vmatprep.mubr.f32.mxu0 0.0
    %294 = vmatmul.mubr.f32.gmra.mrb[0].mxu0 %v205
    %v295 = vpop.f32.mrb[0].mxu0
    %v296 = vadd.f32 %v227, %v295
    %v297 = vpop.f32.mrb[0].mxu0
    %298 = vdwg.mxu0
    %299 = vadd.xlane.f32.xlu0 %v296
    %v300 = vpop.xlane.xlu0 %299
    %v301 = vmul.f32 %v300, 0.03125
    %v302 = vmul.f32 %v296, %v296
    %303 = vadd.xlane.f32.xlu0 %v302
    %v304 = vpop.xlane.xlu0 %303
    %v305 = vmul.f32 %v304, 0.03125
    %v306 = vmul.f32 %v301, %v301
    %v307 = vsub.f32 %v305, %v306
    %v308 = vmax.f32 %v307, 0.0
    %v309 = vsub.f32 %v296, %v301
    %v310 = vadd.f32 %v308, 1e-05
    %v311 = vrsqrt.pop %v310
    %v312 = vmul.f32 %v309, %v311
    %v313 = vld [vmem:[%s7] sm:$0x1]
    %v315 = vlaneseq
    %v316 = vshrl.u32 %v315, 7
    %v317 = vsub.s32 0, %v316
    %v318 = vrot.slane %v313, %v317
    %v320 = vmul.f32 %v312, %v318
    %v321 = vld [vmem:[%s8] sm:$0x1]
    %v323 = vlaneseq
    %v324 = vshrl.u32 %v323, 7
    %v325 = vsub.s32 0, %v324
    %v326 = vrot.slane %v321, %v325
    %v328 = vadd.f32 %v320, %v326
    %v329 = vmul.f32 %v328, 0.01
    %v330 = vmax.f32 %v328, %v329
    %v331 = vld [vmem:[#allocation7] sm:$0xff]
    %v332 = vld [vmem:[#allocation7 + $0x8] sm:$0xff]
    %v333 = vld [vmem:[#allocation7 + $0x10] sm:$0xff]
    %v334 = vld [vmem:[#allocation7 + $0x18] sm:$0xff]
    %v335 = vld [vmem:[#allocation7 + $0x20] sm:$0xff]
    %v336 = vld [vmem:[#allocation7 + $0x28] sm:$0xff]
    %v337 = vld [vmem:[#allocation7 + $0x30] sm:$0xff]
    %v338 = vld [vmem:[#allocation7 + $0x38] sm:$0xff]
    %v339 = vld [vmem:[#allocation7 + $0x40] sm:$0xff]
    %v340 = vld [vmem:[#allocation7 + $0x48] sm:$0xff]
    %v341 = vld [vmem:[#allocation7 + $0x50] sm:$0xff]
    %v342 = vld [vmem:[#allocation7 + $0x58] sm:$0xff]
    %v343 = vld [vmem:[#allocation7 + $0x60] sm:$0xff]
    %v344 = vld [vmem:[#allocation7 + $0x68] sm:$0xff]
    %v345 = vld [vmem:[#allocation7 + $0x70] sm:$0xff]
    %v346 = vld [vmem:[#allocation7 + $0x78] sm:$0xff]
    %v347 = vld [vmem:[%s10] sm:$0x1]
    %v349 = vlaneseq
    %v350 = vshrl.u32 %v349, 7
    %v351 = vsub.s32 0, %v350
    %v352 = vrot.slane %v347, %v351
    %354 = vmatprep.subr.mxu0 0.0
    %355 = vmatpush1.msra.mxu0 %v331
    %356 = vmatprep.subr.mxu0 0.0
    %357 = vmatpush1.msra.mxu0 %v332
    %358 = vmatprep.subr.mxu0 0.0
    %359 = vmatpush1.msra.mxu0 %v333
    %360 = vmatprep.subr.mxu0 0.0
    %361 = vmatpush1.msra.mxu0 %v334
    %362 = vmatprep.subr.mxu0 0.0
    %363 = vmatpush1.msra.mxu0 %v335
    %364 = vmatprep.subr.mxu0 0.0
    %365 = vmatpush1.msra.mxu0 %v336
    %366 = vmatprep.subr.mxu0 0.0
    %367 = vmatpush1.msra.mxu0 %v337
    %368 = vmatprep.subr.mxu0 0.0
    %369 = vmatpush1.msra.mxu0 %v338
    %370 = vmatprep.subr.mxu0 0.0
    %371 = vmatpush1.msra.mxu0 %v339
    %372 = vmatprep.subr.mxu0 0.0
    %373 = vmatpush1.msra.mxu0 %v340
    %374 = vmatprep.subr.mxu0 0.0
    %375 = vmatpush1.msra.mxu0 %v341
    %376 = vmatprep.subr.mxu0 0.0
    %377 = vmatpush1.msra.mxu0 %v342
    %378 = vmatprep.subr.mxu0 0.0
    %379 = vmatpush1.msra.mxu0 %v343
    %380 = vmatprep.subr.mxu0 0.0
    %381 = vmatpush1.msra.mxu0 %v344
    %382 = vmatprep.subr.mxu0 0.0
    %383 = vmatpush1.msra.mxu0 %v345
    %384 = vmatprep.subr.mxu0 0.0
    %385 = vmatpush1.msra.mxu0 %v346
    %386 = vmatprep.subr.mxu0 0.0
    %387 = vmatpush1.msra.mxu0 0.0
    %388 = vmatprep.subr.mxu0 0.0
    %389 = vmatpush1.msra.mxu0 0.0
    %390 = vmatprep.subr.mxu0 0.0
    %391 = vmatpush1.msra.mxu0 0.0
    %392 = vmatprep.subr.mxu0 0.0
    %393 = vmatpush1.msra.mxu0 0.0
    %394 = vmatprep.subr.mxu0 0.0
    %395 = vmatpush1.msra.mxu0 0.0
    %396 = vmatprep.subr.mxu0 0.0
    %397 = vmatpush1.msra.mxu0 0.0
    %398 = vmatprep.subr.mxu0 0.0
    %399 = vmatpush1.msra.mxu0 0.0
    %400 = vmatprep.subr.mxu0 0.0
    %401 = vmatpush1.msra.mxu0 0.0
    %402 = vmatprep.subr.mxu0 0.0
    %403 = vmatpush1.msra.mxu0 0.0
    %404 = vmatprep.subr.mxu0 0.0
    %405 = vmatpush1.msra.mxu0 0.0
    %406 = vmatprep.subr.mxu0 0.0
    %407 = vmatpush1.msra.mxu0 0.0
    %408 = vmatprep.subr.mxu0 0.0
    %409 = vmatpush1.msra.mxu0 0.0
    %410 = vmatprep.subr.mxu0 0.0
    %411 = vmatpush1.msra.mxu0 0.0
    %412 = vmatprep.subr.mxu0 0.0
    %413 = vmatpush1.msra.mxu0 0.0
    %414 = vmatprep.subr.mxu0 0.0
    %415 = vmatpush1.msra.mxu0 0.0
    %416 = vmatprep.subr.mxu0 0.0
    %417 = vmatpush1.msra.mxu0 0.0
    %418 = vmatprep.mubr.f32.mxu0 0.0
    %419 = vmatmul.mubr.f32.gmra.mrb[0].mxu0 %v330
    %v420 = vpop.f32.mrb[0].mxu0
    %v421 = vadd.f32 %v352, %v420
    %v422 = vpop.f32.mrb[0].mxu0
    %423 = vdwg.mxu0
    %424 = vst [vmem:[#allocation8] sm:$0xff] %v421
    // Predicated region
    $region58: #{forward.1} parent=1 // pred_check
      _
    $region59: #{forward.1} parent=1 // pred_check_branch
      %426 = sbr.rel (0) target = $region61
    $region60: #{forward.1} parent=1 // pred_region
      %s428 = ssub.s32 128, 128
      %429 = vsyncadd [#allocation4], %s428
      %s431 = sshll.u32 [#allocation8], 4
      %s432 = int_to_ptr.vmem [resolvable:$true] %s431
      %434 = dma.vmem_to_hbm [thread:$0]  %s432, 128, %s11, [#allocation4]
    $region61: #{forward.1} parent=1 // pred_fallthru
      _
    // Predicated region
    $region62: #{forward.1} parent=1 // pred_check
      _
    $region63: #{forward.1} parent=1 // pred_check_branch
      %436 = sbr.rel (0) target = $region65
    $region64: #{forward.1} parent=1 // pred_region
      %437 = dma.done [#allocation4], 128
    $region65: #{forward.1} parent=1 // pred_fallthru
      _
    %438 = vsyncpa [#allocation3], 1
    %439 = vsyncpa [#allocation6], 1
    %440 = vsyncpa [#allocation4], 1

</llo_original>
